<compile_context>
chip_gen: v6e
topology: v6e:2x2x1
jax: 0.10.0
libtpu: 0.0.40
codegen_flags: <defaults>
</compile_context>

<pallas_src>
import functools

import jax
import jax.numpy as jnp
import numpy as np
from jax.experimental import pallas as pl
from jax.experimental.pallas import tpu as pltpu


def _round_up(x, m):
    return (x + m - 1) // m * m


def _cdiv(a, b):
    return -(-a // b)


def _vmem_capacity_bytes():
    try:
        return int(pltpu.get_tpu_info().vmem_capacity_bytes)
    except Exception:
        return 64 << 20  # conservative fallback (v7x per-core VMEM)


def _plan_tiles(B, L, E, fs_max, n_conv, out_pad):
    """Generation-aware batch-tile / time-chunk / vmem-limit selection."""
    cw = fs_max - 1
    l_need = L + cw                        # time rows the conv windows must cover
    lc_min = _round_up(max(cw, 16), 16)    # keep bf16 sublane packing aligned
    lc = max(lc_min, min(128, _round_up(max(16, (l_need + 1) // 2), 16)))
    bt = min(_round_up(B, 8), 128)

    vmem_cap = _vmem_capacity_bytes()
    budget = vmem_cap // 3                 # headroom for compiler temporaries

    def est(bt_, lc_):
        return (2 * bt_ * lc_ * E * 2            # double-buffered x chunk (bf16)
                + bt_ * (lc_ + cw) * E * 2       # window scratch (bf16)
                + bt_ * n_conv * 4               # running-max scratch (f32)
                + 2 * bt_ * lc_ * n_conv * 4     # conv chunk value + slack (f32)
                + 2 * bt_ * out_pad * 4          # output block (f32)
                + 2 * (fs_max * E * n_conv * 2   # conv weights (bf16)
                       + n_conv * out_pad * 4    # fc weights (f32)
                       + 4 * out_pad * 4))       # small vectors

    while est(bt, lc) > budget and bt > 8:
        bt = max(8, _round_up(bt // 2, 8))
    while est(bt, lc) > budget and lc > lc_min:
        lc = max(lc_min, _round_up(lc // 2, 16))

    b_pad = _round_up(B, bt)
    # v7x has 2 TensorCores: give the "parallel" batch axis >= 2 tiles to shard.
    if b_pad // bt == 1 and b_pad >= 16 and b_pad % 16 == 0:
        bt = b_pad // 2
    n_tc = _cdiv(l_need, lc)
    vmem_limit = int(min(vmem_cap * 9 // 10, max(4 * est(bt, lc), 32 << 20)))
    return bt, b_pad, lc, n_tc, vmem_limit


def _textcnn_kernel(x_ref, wconv_ref, bconv_ref, vlen_ref, fcw_ref, fcb_ref,
                    out_ref, win_ref, acc_ref):
    """One (batch-tile, time-chunk) step: in-kernel tap folding -> conv matmuls
    -> masked running max; at the last chunk: + bias, fc matmul, store."""
    bt, lc, e = x_ref.shape
    fs_max = wconv_ref.shape[0]
    n_conv = wconv_ref.shape[2]
    cw = win_ref.shape[1] - lc             # carried rows = fs_max - 1
    t = pl.program_id(1)
    n_tc = pl.num_programs(1)

    @pl.when(t == 0)
    def _init():
        if cw:
            win_ref[:, :cw, :] = jnp.zeros((bt, cw, e), win_ref.dtype)
        acc_ref[...] = jnp.full((bt, n_conv), -jnp.inf, acc_ref.dtype)

    # window row j  <->  global time row  t*lc - cw + j
    win_ref[:, cw:, :] = x_ref[...]

    # Fused valid conv over all filter banks: fs_max shifted-slice matmuls with
    # f32 accumulation.  Output position p = t*lc - cw + q uses rows p..p+fs-1;
    # taps a bank does not use carry zero weights.
    conv = jnp.dot(win_ref[:, 0:lc, :].reshape(bt * lc, e), wconv_ref[0],
                   preferred_element_type=jnp.float32)
    for i in range(1, fs_max):
        conv = conv + jnp.dot(win_ref[:, i:i + lc, :].reshape(bt * lc, e),
                              wconv_ref[i], preferred_element_type=jnp.float32)
    conv = conv.reshape(bt, lc, n_conv)

    # Carry the last (fs_max - 1) input rows for the next time chunk.
    if cw:
        win_ref[:, :cw, :] = x_ref[:, lc - cw:, :]

    # In-kernel validity mask (replaces the old (1, L, 128) additive-mask DMA):
    # bank k is valid for 0 <= p < L - fs_k + 1.
    pos = jax.lax.broadcasted_iota(jnp.int32, (1, lc, n_conv), 1) + (t * lc - cw)
    valid = (pos >= 0) & (pos < vlen_ref[...][:, None, :])
    chunk_max = jnp.max(jnp.where(valid, conv, -jnp.inf), axis=1)  # (bt, n_conv)
    acc_ref[...] = jnp.maximum(acc_ref[...], chunk_max)

    @pl.when(t == n_tc - 1)
    def _finalize():
        # bias after max (max(c + b) == max(c) + b); dropout == identity (eval).
        pooled = acc_ref[...] + bconv_ref[...]
        out = jnp.dot(pooled, fcw_ref[...],
                      preferred_element_type=jnp.float32) + fcb_ref[...]
        out_ref[...] = out.astype(out_ref.dtype)


def pack_params(conv_ws, conv_bs, fc_w_t, fc_b, filter_sizes):
    """One-time (load-time) packing of the parameters into fused, lane-dense TPU
    layouts.  Kept out of the per-call jitted path (numpy, no XLA ops)."""
    fs_max = max(filter_sizes)
    K = len(filter_sizes)
    E, F = conv_ws[0].shape[1], conv_ws[0].shape[2]
    out_dim = fc_w_t.shape[1]
    n_conv = _round_up(K * F, 128)
    out_pad = _round_up(out_dim, 128)

    wconv = np.zeros((fs_max, E, n_conv), np.float32)   # unused taps stay zero
    bconv = np.zeros((1, n_conv), np.float32)
    for k, fs in enumerate(filter_sizes):
        wconv[:fs, :, k * F:(k + 1) * F] = np.asarray(conv_ws[k], np.float32)
        bconv[0, k * F:(k + 1) * F] = np.asarray(conv_bs[k], np.float32).reshape(-1)

    fcw = np.zeros((n_conv, out_pad), np.float32)       # zero rows absorb padding
    fcw[:K * F, :out_dim] = np.asarray(fc_w_t, np.float32)
    fcb = np.zeros((1, out_pad), np.float32)
    fcb[0, :out_dim] = np.asarray(fc_b, np.float32).reshape(-1)

    return (jnp.asarray(wconv, jnp.bfloat16), jnp.asarray(bconv),
            jnp.asarray(fcw), jnp.asarray(fcb))


@functools.partial(jax.jit,
                   static_argnames=("filter_sizes", "n_filters", "out_dim"))
def textcnn_forward(x, wconv, bconv, fcw, fcb, *, filter_sizes, n_filters,
                    out_dim=2):
    B, L, E = x.shape
    fs_max = max(filter_sizes)
    if L < fs_max:
        raise ValueError(f"sequence length {L} < largest filter size {fs_max} "
                         "(PyTorch's Conv2d would also fail here)")
    n_conv = wconv.shape[2]
    out_pad = fcw.shape[1]
    cw = fs_max - 1

    bt, b_pad, lc, n_tc, vmem_limit = _plan_tiles(B, L, E, fs_max, n_conv, out_pad)
    l_x = n_tc * lc

    # Per-call data prep is just pad + bf16 cast (no im2col slab in HBM).
    x_pad = jnp.pad(x, ((0, b_pad - B), (0, l_x - L), (0, 0))).astype(jnp.bfloat16)

    # Per-bank valid conv length (trace-time numpy constant, no runtime ops).
    vlen_np = np.ones((1, n_conv), np.int32)     # padding lanes: any length >= 1
    for k, fs in enumerate(filter_sizes):
        vlen_np[0, k * n_filters:(k + 1) * n_filters] = L - fs + 1
    vlen = jnp.asarray(vlen_np)

    grid = (b_pad // bt, n_tc)
    out = pl.pallas_call(
        _textcnn_kernel,
        out_shape=jax.ShapeDtypeStruct((b_pad, out_pad), jnp.float32),
        grid=grid,
        in_specs=[
            pl.BlockSpec((bt, lc, E), lambda b, t: (b, t, 0)),          # x chunk
            pl.BlockSpec((fs_max, E, n_conv), lambda b, t: (0, 0, 0)),  # conv W taps
            pl.BlockSpec((1, n_conv), lambda b, t: (0, 0)),             # conv bias
            pl.BlockSpec((1, n_conv), lambda b, t: (0, 0)),             # valid lengths
            pl.BlockSpec((n_conv, out_pad), lambda b, t: (0, 0)),       # fc W (padded)
            pl.BlockSpec((1, out_pad), lambda b, t: (0, 0)),            # fc b (padded)
        ],
        out_specs=pl.BlockSpec((bt, out_pad), lambda b, t: (b, 0)),
        scratch_shapes=[
            pltpu.VMEM((bt, lc + cw, E), jnp.bfloat16),   # chunk window + carry
            pltpu.VMEM((bt, n_conv), jnp.float32),        # running max accumulator
        ],
        compiler_params=pltpu.CompilerParams(
            dimension_semantics=("parallel", "arbitrary"),
            vmem_limit_bytes=vmem_limit),
    )(x_pad, wconv, bconv, vlen, fcw, fcb)

    return out[:B, :out_dim]


def ref_forward(x, conv_ws, conv_bs, fc_w_t, fc_b, filter_sizes):
    """Pure-JAX f32 reference mirroring the PyTorch forward (inference mode)."""
    B, L, _E = x.shape
    pooled = []
    for w, b, fs in zip(conv_ws, conv_bs, filter_sizes):
        T = L - fs + 1
        acc = jnp.zeros((B, T, w.shape[-1]), jnp.float32)
        for i in range(fs):
            acc = acc + jnp.einsum("bte,ef->btf", x[:, i:i + T, :], w[i])
        acc = acc + b
        pooled.append(jnp.max(acc, axis=1))
    cat = jnp.concatenate(pooled, axis=1)
    return cat @ fc_w_t + fc_b


if __name__ == "__main__":
    # CNN(embedding_dim=32, n_filters=8, filter_sizes=(3,4,5), dropout=0.5)
    B, L, E = 2, 16, 32
    n_filters = 8
    filter_sizes = (3, 4, 5)

    key = jax.random.PRNGKey(0)
    k_x, k_fcw, k_fcb, *k_conv = jax.random.split(key, 3 + 2 * len(filter_sizes))

    x = jax.random.normal(k_x, (B, L, E), jnp.float32)

    conv_ws, conv_bs = [], []
    for idx, fs in enumerate(filter_sizes):
        kw, kb = k_conv[2 * idx], k_conv[2 * idx + 1]
        # PyTorch Conv2d weight (n_filters, 1, fs, E) stored here as (fs, E, n_filters)
        conv_ws.append(0.1 * jax.random.normal(kw, (fs, E, n_filters), jnp.float32))
        conv_bs.append(0.1 * jax.random.normal(kb, (1, n_filters), jnp.float32))

    in_features = n_filters * len(filter_sizes)
    # PyTorch Linear weight (2, in_features) stored transposed as (in_features, 2)
    fc_w_t = 0.1 * jax.random.normal(k_fcw, (in_features, 2), jnp.float32)
    fc_b = 0.1 * jax.random.normal(k_fcb, (1, 2), jnp.float32)

    # One-time weight packing (load-time), then the jitted Pallas forward.
    wconv, bconv, fcw, fcb = pack_params(conv_ws, conv_bs, fc_w_t, fc_b,
                                         filter_sizes)
    out = textcnn_forward(x, wconv, bconv, fcw, fcb,
                          filter_sizes=filter_sizes, n_filters=n_filters,
                          out_dim=2)
    out = jax.block_until_ready(out)

    ref = ref_forward(x, conv_ws, conv_bs, fc_w_t, fc_b, filter_sizes)
    assert out.shape == (B, 2), out.shape
    # bf16 matmul inputs with f32 accumulation -> loose tolerance vs f32 ref.
    assert jnp.allclose(out, ref, atol=2e-2, rtol=2e-2), (out, ref)

    print("KERNEL_OK")
</pallas_src>

<mosaic_0001>
module attributes {stable_mosaic.version = 11 : i64} {
  func.func @_textcnn_kernel(%arg0: i32, %arg1: i32, %arg2: memref<8x16x32xbf16, #tpu.memory_space<vmem>>, %arg3: memref<5x32x128xbf16, #tpu.memory_space<vmem>>, %arg4: memref<1x128xf32, #tpu.memory_space<vmem>>, %arg5: memref<1x128xi32, #tpu.memory_space<vmem>>, %arg6: memref<128x128xf32, #tpu.memory_space<vmem>>, %arg7: memref<1x128xf32, #tpu.memory_space<vmem>>, %arg8: memref<8x128xf32, #tpu.memory_space<vmem>>, %arg9: memref<8x20x32xbf16, #tpu.memory_space<vmem>>, %arg10: memref<8x128xf32, #tpu.memory_space<vmem>>) attributes {dimension_semantics = [#tpu.dimension_semantics<parallel>, #tpu.dimension_semantics<arbitrary>], iteration_bounds = array<i64: 1, 2>, scalar_prefetch = 0 : i64, scratch_operands = 2 : i64, tpu.core_type = #tpu.core_type<tc>, window_params = [{transform_indices = @transform_0, window_bounds = array<i64: 8, 16, 32>}, {pipeline_mode = #tpu.pipeline_mode<synchronous>, transform_indices = @transform_1, window_bounds = array<i64: 5, 32, 128>}, {pipeline_mode = #tpu.pipeline_mode<synchronous>, transform_indices = @transform_2, window_bounds = array<i64: 1, 128>}, {pipeline_mode = #tpu.pipeline_mode<synchronous>, transform_indices = @transform_3, window_bounds = array<i64: 1, 128>}, {pipeline_mode = #tpu.pipeline_mode<synchronous>, transform_indices = @transform_4, window_bounds = array<i64: 128, 128>}, {pipeline_mode = #tpu.pipeline_mode<synchronous>, transform_indices = @transform_5, window_bounds = array<i64: 1, 128>}, {transform_indices = @transform_6, window_bounds = array<i64: 8, 128>}]} {
    %c0_i32 = arith.constant 0 : i32
    %0 = arith.cmpi eq, %arg1, %c0_i32 : i32
    %1 = arith.extui %0 : i1 to i32
    %c0_i32_0 = arith.constant 0 : i32
    %2 = arith.cmpi ne, %1, %c0_i32_0 : i32
    scf.if %2 {
      %cst_51 = arith.constant 0.000000e+00 : bf16
      %60 = vector.broadcast %cst_51 : bf16 to vector<8x4x32xbf16>
      %c0_52 = arith.constant 0 : index
      %c0_53 = arith.constant 0 : index
      %c0_54 = arith.constant 0 : index
      %61 = vector.load %arg9[%c0_52, %c0_53, %c0_54] : memref<8x20x32xbf16, #tpu.memory_space<vmem>>, vector<8x4x32xbf16>
      tpu.vector_store %arg9[%c0_52, %c0_53, %c0_54], %60 {strides = array<i32>} : memref<8x20x32xbf16, #tpu.memory_space<vmem>>, vector<8x4x32xbf16>,
      %cst_55 = arith.constant 0xFF800000 : f32
      %62 = vector.broadcast %cst_55 : f32 to vector<8x128xf32>
      %c0_56 = arith.constant 0 : index
      %c0_57 = arith.constant 0 : index
      %63 = vector.load %arg10[%c0_56, %c0_57] : memref<8x128xf32, #tpu.memory_space<vmem>>, vector<8x128xf32>
      tpu.vector_store %arg10[%c0_56, %c0_57], %62 {strides = array<i32>} : memref<8x128xf32, #tpu.memory_space<vmem>>, vector<8x128xf32>,
    } else {
    }
    %c0 = arith.constant 0 : index
    %c0_1 = arith.constant 0 : index
    %c0_2 = arith.constant 0 : index
    %3 = vector.load %arg2[%c0, %c0_1, %c0_2] : memref<8x16x32xbf16, #tpu.memory_space<vmem>>, vector<8x16x32xbf16>
    %c0_3 = arith.constant 0 : index
    %c4 = arith.constant 4 : index
    %c0_4 = arith.constant 0 : index
    %4 = vector.load %arg9[%c0_3, %c4, %c0_4] : memref<8x20x32xbf16, #tpu.memory_space<vmem>>, vector<8x16x32xbf16>
    tpu.vector_store %arg9[%c0_3, %c4, %c0_4], %3 {strides = array<i32>} : memref<8x20x32xbf16, #tpu.memory_space<vmem>>, vector<8x16x32xbf16>,
    %c0_5 = arith.constant 0 : index
    %c0_6 = arith.constant 0 : index
    %c0_7 = arith.constant 0 : index
    %5 = vector.load %arg9[%c0_5, %c0_6, %c0_7] : memref<8x20x32xbf16, #tpu.memory_space<vmem>>, vector<8x16x32xbf16>
    %6 = vector.shape_cast %5 : vector<8x16x32xbf16> to vector<128x32xbf16>
    %c0_8 = arith.constant 0 : index
    %c0_9 = arith.constant 0 : index
    %c0_10 = arith.constant 0 : index
    %7 = vector.load %arg3[%c0_8, %c0_9, %c0_10] : memref<5x32x128xbf16, #tpu.memory_space<vmem>>, vector<1x32x128xbf16>
    %8 = vector.shape_cast %7 : vector<1x32x128xbf16> to vector<32x128xbf16>
    %cst = arith.constant dense<0.000000e+00> : vector<128x128xf32>
    %9 = tpu.matmul %6, %8, %cst {dimension_numbers = #tpu.dot_dimension_numbers<[1], [0], [0], [1], [0, 0, 1, 1], [], []>} : vector<128x32xbf16>, vector<32x128xbf16>, vector<128x128xf32> -> vector<128x128xf32>
    %c0_11 = arith.constant 0 : index
    %c1 = arith.constant 1 : index
    %c0_12 = arith.constant 0 : index
    %10 = vector.load %arg9[%c0_11, %c1, %c0_12] : memref<8x20x32xbf16, #tpu.memory_space<vmem>>, vector<8x16x32xbf16>
    %11 = vector.shape_cast %10 : vector<8x16x32xbf16> to vector<128x32xbf16>
    %c1_13 = arith.constant 1 : index
    %c0_14 = arith.constant 0 : index
    %c0_15 = arith.constant 0 : index
    %12 = vector.load %arg3[%c1_13, %c0_14, %c0_15] : memref<5x32x128xbf16, #tpu.memory_space<vmem>>, vector<1x32x128xbf16>
    %13 = vector.shape_cast %12 : vector<1x32x128xbf16> to vector<32x128xbf16>
    %cst_16 = arith.constant dense<0.000000e+00> : vector<128x128xf32>
    %14 = tpu.matmul %11, %13, %cst_16 {dimension_numbers = #tpu.dot_dimension_numbers<[1], [0], [0], [1], [0, 0, 1, 1], [], []>} : vector<128x32xbf16>, vector<32x128xbf16>, vector<128x128xf32> -> vector<128x128xf32>
    %15 = arith.addf %9, %14 : vector<128x128xf32>
    %c0_17 = arith.constant 0 : index
    %c2 = arith.constant 2 : index
    %c0_18 = arith.constant 0 : index
    %16 = vector.load %arg9[%c0_17, %c2, %c0_18] : memref<8x20x32xbf16, #tpu.memory_space<vmem>>, vector<8x16x32xbf16>
    %17 = vector.shape_cast %16 : vector<8x16x32xbf16> to vector<128x32xbf16>
    %c2_19 = arith.constant 2 : index
    %c0_20 = arith.constant 0 : index
    %c0_21 = arith.constant 0 : index
    %18 = vector.load %arg3[%c2_19, %c0_20, %c0_21] : memref<5x32x128xbf16, #tpu.memory_space<vmem>>, vector<1x32x128xbf16>
    %19 = vector.shape_cast %18 : vector<1x32x128xbf16> to vector<32x128xbf16>
    %cst_22 = arith.constant dense<0.000000e+00> : vector<128x128xf32>
    %20 = tpu.matmul %17, %19, %cst_22 {dimension_numbers = #tpu.dot_dimension_numbers<[1], [0], [0], [1], [0, 0, 1, 1], [], []>} : vector<128x32xbf16>, vector<32x128xbf16>, vector<128x128xf32> -> vector<128x128xf32>
    %21 = arith.addf %15, %20 : vector<128x128xf32>
    %c0_23 = arith.constant 0 : index
    %c3 = arith.constant 3 : index
    %c0_24 = arith.constant 0 : index
    %22 = vector.load %arg9[%c0_23, %c3, %c0_24] : memref<8x20x32xbf16, #tpu.memory_space<vmem>>, vector<8x16x32xbf16>
    %23 = vector.shape_cast %22 : vector<8x16x32xbf16> to vector<128x32xbf16>
    %c3_25 = arith.constant 3 : index
    %c0_26 = arith.constant 0 : index
    %c0_27 = arith.constant 0 : index
    %24 = vector.load %arg3[%c3_25, %c0_26, %c0_27] : memref<5x32x128xbf16, #tpu.memory_space<vmem>>, vector<1x32x128xbf16>
    %25 = vector.shape_cast %24 : vector<1x32x128xbf16> to vector<32x128xbf16>
    %cst_28 = arith.constant dense<0.000000e+00> : vector<128x128xf32>
    %26 = tpu.matmul %23, %25, %cst_28 {dimension_numbers = #tpu.dot_dimension_numbers<[1], [0], [0], [1], [0, 0, 1, 1], [], []>} : vector<128x32xbf16>, vector<32x128xbf16>, vector<128x128xf32> -> vector<128x128xf32>
    %27 = arith.addf %21, %26 : vector<128x128xf32>
    %c0_29 = arith.constant 0 : index
    %c4_30 = arith.constant 4 : index
    %c0_31 = arith.constant 0 : index
    %28 = vector.load %arg9[%c0_29, %c4_30, %c0_31] : memref<8x20x32xbf16, #tpu.memory_space<vmem>>, vector<8x16x32xbf16>
    %29 = vector.shape_cast %28 : vector<8x16x32xbf16> to vector<128x32xbf16>
    %c4_32 = arith.constant 4 : index
    %c0_33 = arith.constant 0 : index
    %c0_34 = arith.constant 0 : index
    %30 = vector.load %arg3[%c4_32, %c0_33, %c0_34] : memref<5x32x128xbf16, #tpu.memory_space<vmem>>, vector<1x32x128xbf16>
    %31 = vector.shape_cast %30 : vector<1x32x128xbf16> to vector<32x128xbf16>
    %cst_35 = arith.constant dense<0.000000e+00> : vector<128x128xf32>
    %32 = tpu.matmul %29, %31, %cst_35 {dimension_numbers = #tpu.dot_dimension_numbers<[1], [0], [0], [1], [0, 0, 1, 1], [], []>} : vector<128x32xbf16>, vector<32x128xbf16>, vector<128x128xf32> -> vector<128x128xf32>
    %33 = arith.addf %27, %32 : vector<128x128xf32>
    %34 = vector.shape_cast %33 : vector<128x128xf32> to vector<8x16x128xf32>
    %c0_36 = arith.constant 0 : index
    %c12 = arith.constant 12 : index
    %c0_37 = arith.constant 0 : index
    %35 = vector.load %arg2[%c0_36, %c12, %c0_37] : memref<8x16x32xbf16, #tpu.memory_space<vmem>>, vector<8x4x32xbf16>
    %c0_38 = arith.constant 0 : index
    %c0_39 = arith.constant 0 : index
    %c0_40 = arith.constant 0 : index
    %36 = vector.load %arg9[%c0_38, %c0_39, %c0_40] : memref<8x20x32xbf16, #tpu.memory_space<vmem>>, vector<8x4x32xbf16>
    tpu.vector_store %arg9[%c0_38, %c0_39, %c0_40], %35 {strides = array<i32>} : memref<8x20x32xbf16, #tpu.memory_space<vmem>>, vector<8x4x32xbf16>,
    %37 = tpu.iota {dimensions = array<i32: 1>} : vector<1x16x128xi32>
    %c16_i32 = arith.constant 16 : i32
    %38 = arith.muli %arg1, %c16_i32 : i32
    %c4_i32 = arith.constant 4 : i32
    %39 = arith.subi %38, %c4_i32 : i32
    %40 = vector.broadcast %39 : i32 to vector<1x16x128xi32>
    %41 = arith.addi %37, %40 : vector<1x16x128xi32>
    %c0_i32_41 = arith.constant 0 : i32
    %42 = vector.broadcast %c0_i32_41 : i32 to vector<1x16x128xi32>
    %43 = arith.cmpi sge, %41, %42 : vector<1x16x128xi32>
    %c0_42 = arith.constant 0 : index
    %c0_43 = arith.constant 0 : index
    %44 = vector.load %arg5[%c0_42, %c0_43] : memref<1x128xi32, #tpu.memory_space<vmem>>, vector<1x128xi32>
    %45 = vector.shape_cast %44 : vector<1x128xi32> to vector<1x1x128xi32>
    %46 = vector.broadcast %45 : vector<1x1x128xi32> to vector<1x16x128xi32>
    %47 = arith.cmpi slt, %41, %46 : vector<1x16x128xi32>
    %48 = arith.andi %43, %47 : vector<1x16x128xi1>
    %cst_44 = arith.constant 0xFF800000 : f32
    %49 = vector.shape_cast %48 : vector<1x16x128xi1> to vector<1x16x128xi1>
    %50 = vector.broadcast %49 : vector<1x16x128xi1> to vector<8x16x128xi1>
    %51 = vector.broadcast %cst_44 : f32 to vector<8x16x128xf32>
    %52 = arith.select %50, %34, %51 : vector<8x16x128xi1>, vector<8x16x128xf32>
    %cst_45 = arith.constant dense<0xFF800000> : vector<8x128xf32>
    %53 = vector.multi_reduction <maximumf>, %52, %cst_45 [1] : vector<8x16x128xf32> to vector<8x128xf32>
    %c0_46 = arith.constant 0 : index
    %c0_47 = arith.constant 0 : index
    %54 = vector.load %arg10[%c0_46, %c0_47] : memref<8x128xf32, #tpu.memory_space<vmem>>, vector<8x128xf32>
    %55 = arith.maximumf %54, %53 : vector<8x128xf32>
    %c0_48 = arith.constant 0 : index
    %c0_49 = arith.constant 0 : index
    %56 = vector.load %arg10[%c0_48, %c0_49] : memref<8x128xf32, #tpu.memory_space<vmem>>, vector<8x128xf32>
    tpu.vector_store %arg10[%c0_48, %c0_49], %55 {strides = array<i32>} : memref<8x128xf32, #tpu.memory_space<vmem>>, vector<8x128xf32>,
    %c1_i32 = arith.constant 1 : i32
    %57 = arith.cmpi eq, %arg1, %c1_i32 : i32
    %58 = arith.extui %57 : i1 to i32
    %c0_i32_50 = arith.constant 0 : i32
    %59 = arith.cmpi ne, %58, %c0_i32_50 : i32
    scf.if %59 {
      %c0_51 = arith.constant 0 : index
      %c0_52 = arith.constant 0 : index
      %60 = vector.load %arg10[%c0_51, %c0_52] : memref<8x128xf32, #tpu.memory_space<vmem>>, vector<8x128xf32>
      %c0_53 = arith.constant 0 : index
      %c0_54 = arith.constant 0 : index
      %61 = vector.load %arg4[%c0_53, %c0_54] : memref<1x128xf32, #tpu.memory_space<vmem>>, vector<1x128xf32>
      %62 = vector.broadcast %61 : vector<1x128xf32> to vector<8x128xf32>
      %63 = arith.addf %60, %62 : vector<8x128xf32>
      %c0_55 = arith.constant 0 : index
      %c0_56 = arith.constant 0 : index
      %64 = vector.load %arg6[%c0_55, %c0_56] : memref<128x128xf32, #tpu.memory_space<vmem>>, vector<128x128xf32>
      %cst_57 = arith.constant dense<0.000000e+00> : vector<8x128xf32>
      %65 = tpu.matmul %63, %64, %cst_57 {dimension_numbers = #tpu.dot_dimension_numbers<[1], [0], [0], [1], [0, 0, 1, 1], [], []>} : vector<8x128xf32>, vector<128x128xf32>, vector<8x128xf32> -> vector<8x128xf32>
      %c0_58 = arith.constant 0 : index
      %c0_59 = arith.constant 0 : index
      %66 = vector.load %arg7[%c0_58, %c0_59] : memref<1x128xf32, #tpu.memory_space<vmem>>, vector<1x128xf32>
      %67 = vector.broadcast %66 : vector<1x128xf32> to vector<8x128xf32>
      %68 = arith.addf %65, %67 : vector<8x128xf32>
      %c0_60 = arith.constant 0 : index
      %c0_61 = arith.constant 0 : index
      %69 = vector.load %arg8[%c0_60, %c0_61] : memref<8x128xf32, #tpu.memory_space<vmem>>, vector<8x128xf32>
      tpu.vector_store %arg8[%c0_60, %c0_61], %68 {strides = array<i32>} : memref<8x128xf32, #tpu.memory_space<vmem>>, vector<8x128xf32>,
    } else {
    }
    return
  }
  func.func @transform_0(%arg0: i32, %arg1: i32) -> (i32, i32, i32) {
    %c0_i32 = arith.constant 0 : i32
    %c0_i32_0 = arith.constant 0 : i32
    return %arg0, %arg1, %c0_i32 : i32, i32, i32
  }
  func.func @transform_1(%arg0: i32, %arg1: i32) -> (i32, i32, i32) {
    %c0_i32 = arith.constant 0 : i32
    %c0_i32_0 = arith.constant 0 : i32
    %c0_i32_1 = arith.constant 0 : i32
    %c0_i32_2 = arith.constant 0 : i32
    return %c0_i32, %c0_i32_0, %c0_i32_1 : i32, i32, i32
  }
  func.func @transform_2(%arg0: i32, %arg1: i32) -> (i32, i32) {
    %c0_i32 = arith.constant 0 : i32
    %c0_i32_0 = arith.constant 0 : i32
    %c0_i32_1 = arith.constant 0 : i32
    return %c0_i32, %c0_i32_0 : i32, i32
  }
  func.func @transform_3(%arg0: i32, %arg1: i32) -> (i32, i32) {
    %c0_i32 = arith.constant 0 : i32
    %c0_i32_0 = arith.constant 0 : i32
    %c0_i32_1 = arith.constant 0 : i32
    return %c0_i32, %c0_i32_0 : i32, i32
  }
  func.func @transform_4(%arg0: i32, %arg1: i32) -> (i32, i32) {
    %c0_i32 = arith.constant 0 : i32
    %c0_i32_0 = arith.constant 0 : i32
    %c0_i32_1 = arith.constant 0 : i32
    return %c0_i32, %c0_i32_0 : i32, i32
  }
  func.func @transform_5(%arg0: i32, %arg1: i32) -> (i32, i32) {
    %c0_i32 = arith.constant 0 : i32
    %c0_i32_0 = arith.constant 0 : i32
    %c0_i32_1 = arith.constant 0 : i32
    return %c0_i32, %c0_i32_0 : i32, i32
  }
  func.func @transform_6(%arg0: i32, %arg1: i32) -> (i32, i32) {
    %c0_i32 = arith.constant 0 : i32
    %c0_i32_0 = arith.constant 0 : i32
    return %arg0, %c0_i32 : i32, i32
  }
}

</mosaic_0001>

<llo_original>
// kernel: textcnn_forward.1
$region0: #{textcnn_forward.1}
  #allocation0 [shape = 'u32[]', space=smem, size = 0x4, offset = 0x4, fixed_abs, tag = 'smem constant byte address 0x4 - core index']
  #allocation1 [shape = 'u32[144,128]{1,0:T(1,128)}', space=vmem, size = 0x12000, scoped, tag = 'internal scratch']
  #allocation2 [shape = 'bf16[8,20,32]{2,1,0:T(8,128)(2,1)}', space=vmem, size = 0xc000, scoped, tag = 'scratch operand']
  #allocation3 [shape = 'f32[8,128]{1,0:T(8,128)}', space=vmem, size = 0x1000, scoped, tag = 'scratch operand']
  %s0 = inlined_call_operand.vmem [shape: bf16[8,32,32], index: 0, kind: input, shape index: {}]
  %s1 = inlined_call_operand.hbm [shape: bf16[5,32,128], index: 1, kind: input, shape index: {}]
  %s2 = inlined_call_operand.vmem [shape: f32[1,128], index: 2, kind: input, shape index: {}]
  %s3 = inlined_call_operand.vmem [shape: s32[1,128], index: 3, kind: input, shape index: {}]
  %s4 = inlined_call_operand.vmem [shape: f32[128,128], index: 4, kind: input, shape index: {}]
  %s5 = inlined_call_operand.vmem [shape: f32[1,128], index: 5, kind: input, shape index: {}]
  %s6 = inlined_call_operand.vmem [shape: f32[8,128], index: 6, kind: output, shape index: {}]
  %s7 = sld [smem:[#allocation0]]
  $region110: #{textcnn_forward.1} parent=0
    _
  %s9 = ssub.s32 1, %s7
  %s10 = scalar_select 0, %s9, %s7
  $region1: #{textcnn_forward.1} parent=0
    #allocation4 [shape = 'u8[65536]{0}', space=vmem, size = 0x10000, scoped, tag = 'input window, operand 0']
    #allocation5 [shape = 'u8[40960]{0}', space=vmem, size = 0xa000, scoped, tag = 'input window, operand 1, single buffered']
    #allocation6 [shape = 's32[2]{0}', space=sflag, size = 0x8, scoped, tag = 'scoped memory for textcnn_forward.1']
    %11 = vsyncpa [#allocation6], 0
    loop: start=0, step=1, limit=4
    $region2: #{textcnn_forward.1} parent=1 // loop_pre_header
      _
    $region3: #{textcnn_forward.1} parent=1 // loop_header
      %s13 = sphi 0, %s17
      %p14 = scmp.ge.s32.totalorder %s13, 4
      %s20 = sphi 0, %s32
      %s21 = sphi 0, %s28
      %s22 = sphi 0, %s20
      %s23 = sphi 0, %s21
      %s24 = sphi 0, %s22
      %s25 = sphi 0, %s23
      %s37 = sphi 0, %s39
      %s40 = sphi 0, %s37
      %s41 = sphi 0, %s40
      %s57 = sphi 0, %s41
      %s61 = sphi 0, %s61
      %s63 = sphi 0, %s61
      %s64 = sphi 0, %s63
      %s78 = sphi 0, %s64
      %s82 = sphi 0, %s82
      %s84 = sphi 0, %s82
      %s85 = sphi 0, %s84
      %s99 = sphi 0, %s85
      %s103 = sphi 0, %s103
      %s105 = sphi 0, %s103
      %s106 = sphi 0, %s105
      %s120 = sphi 0, %s106
      %s124 = sphi 0, %s124
      %s126 = sphi 0, %s124
      %s127 = sphi 0, %s126
      %s141 = sphi 0, %s127
      %s145 = sphi 0, %s145
      %s147 = sphi 0, %s145
      %s148 = sphi 0, %s147
      %s162 = sphi 0, %s148
      %s168 = sphi 0, %s170
      %s171 = sphi 0, %s168
      %s172 = sphi 0, %s171
      %s188 = sphi 0, %s172
    $region4: #{textcnn_forward.1} parent=1 // loop_header_branch
      %16 = sbr.rel (%p14) target = $region8
    $region5: #{textcnn_forward.1} parent=1 // loop_body
      %s18 = ssub.s32 %s13, 1
      %s19 = ssub.s32 %s13, 2
      %s26 = sadd.s32 1, %s21
      %p27 = scmp.ge.s32.totalorder %s26, 2
      %s28 = scalar_select %p27, 0, %s26
      %s29 = sadd.s32 1, %s20
      %s30 = scalar_select %p27, %s29, %s20
      %p31 = scmp.ge.s32.totalorder %s30, 1
      %s32 = scalar_select %p31, 0, %s30
      %s33 = ssub.s32 %s20, %s32
      %s34 = ssub.s32 %s21, %s28
      %s35 = sor.u32 %s33, %s34
      %p36 = scmp.eq.s32.totalorder %s35, 0
      %s38 = sadd.s32 %s37, 1
      %s39 = scalar_select %p36, %s37, %s38
      %p42 = pneg %p36
      %p43 = scmp.eq.s32.totalorder %s13, 1
      %p44 = por %p42, %p43
      %p45 = scmp.ne.s32.totalorder %s37, %s40
      %p46 = scmp.eq.s32.totalorder %s13, 0
      %p47 = por %p45, %p46
      %p48 = scmp.ne.s32.totalorder %s37, %s40
      %p49 = scmp.eq.s32.totalorder %s18, 1
      %p50 = por %p48, %p49
      %p51 = scmp.ne.s32.totalorder %s40, %s41
      %p52 = scmp.eq.s32.totalorder %s18, 0
      %p53 = por %p51, %p52
      %p54 = scmp.ne.s32.totalorder %s40, %s41
      %p55 = scmp.eq.s32.totalorder %s19, 1
      %p56 = por %p54, %p55
      %p58 = scmp.ne.s32.totalorder %s41, %s57
      %p59 = scmp.eq.s32.totalorder %s19, 0
      %p60 = por %p58, %p59
      %s62 = sadd.s32 %s61, 1
      %p65 = scmp.eq.s32.totalorder %s13, 1
      %p66 = scmp.ne.s32.totalorder %s61, %s63
      %p67 = scmp.eq.s32.totalorder %s13, 0
      %p68 = por %p66, %p67
      %p69 = scmp.ne.s32.totalorder %s61, %s63
      %p70 = scmp.eq.s32.totalorder %s18, 1
      %p71 = por %p69, %p70
      %p72 = scmp.ne.s32.totalorder %s63, %s64
      %p73 = scmp.eq.s32.totalorder %s18, 0
      %p74 = por %p72, %p73
      %p75 = scmp.ne.s32.totalorder %s63, %s64
      %p76 = scmp.eq.s32.totalorder %s19, 1
      %p77 = por %p75, %p76
      %p79 = scmp.ne.s32.totalorder %s64, %s78
      %p80 = scmp.eq.s32.totalorder %s19, 0
      %p81 = por %p79, %p80
      %s83 = sadd.s32 %s82, 1
      %p86 = scmp.eq.s32.totalorder %s13, 1
      %p87 = scmp.ne.s32.totalorder %s82, %s84
      %p88 = scmp.eq.s32.totalorder %s13, 0
      %p89 = por %p87, %p88
      %p90 = scmp.ne.s32.totalorder %s82, %s84
      %p91 = scmp.eq.s32.totalorder %s18, 1
      %p92 = por %p90, %p91
      %p93 = scmp.ne.s32.totalorder %s84, %s85
      %p94 = scmp.eq.s32.totalorder %s18, 0
      %p95 = por %p93, %p94
      %p96 = scmp.ne.s32.totalorder %s84, %s85
      %p97 = scmp.eq.s32.totalorder %s19, 1
      %p98 = por %p96, %p97
      %p100 = scmp.ne.s32.totalorder %s85, %s99
      %p101 = scmp.eq.s32.totalorder %s19, 0
      %p102 = por %p100, %p101
      %s104 = sadd.s32 %s103, 1
      %p107 = scmp.eq.s32.totalorder %s13, 1
      %p108 = scmp.ne.s32.totalorder %s103, %s105
      %p109 = scmp.eq.s32.totalorder %s13, 0
      %p110 = por %p108, %p109
      %p111 = scmp.ne.s32.totalorder %s103, %s105
      %p112 = scmp.eq.s32.totalorder %s18, 1
      %p113 = por %p111, %p112
      %p114 = scmp.ne.s32.totalorder %s105, %s106
      %p115 = scmp.eq.s32.totalorder %s18, 0
      %p116 = por %p114, %p115
      %p117 = scmp.ne.s32.totalorder %s105, %s106
      %p118 = scmp.eq.s32.totalorder %s19, 1
      %p119 = por %p117, %p118
      %p121 = scmp.ne.s32.totalorder %s106, %s120
      %p122 = scmp.eq.s32.totalorder %s19, 0
      %p123 = por %p121, %p122
      %s125 = sadd.s32 %s124, 1
      %p128 = scmp.eq.s32.totalorder %s13, 1
      %p129 = scmp.ne.s32.totalorder %s124, %s126
      %p130 = scmp.eq.s32.totalorder %s13, 0
      %p131 = por %p129, %p130
      %p132 = scmp.ne.s32.totalorder %s124, %s126
      %p133 = scmp.eq.s32.totalorder %s18, 1
      %p134 = por %p132, %p133
      %p135 = scmp.ne.s32.totalorder %s126, %s127
      %p136 = scmp.eq.s32.totalorder %s18, 0
      %p137 = por %p135, %p136
      %p138 = scmp.ne.s32.totalorder %s126, %s127
      %p139 = scmp.eq.s32.totalorder %s19, 1
      %p140 = por %p138, %p139
      %p142 = scmp.ne.s32.totalorder %s127, %s141
      %p143 = scmp.eq.s32.totalorder %s19, 0
      %p144 = por %p142, %p143
      %s146 = sadd.s32 %s145, 1
      %p149 = scmp.eq.s32.totalorder %s13, 1
      %p150 = scmp.ne.s32.totalorder %s145, %s147
      %p151 = scmp.eq.s32.totalorder %s13, 0
      %p152 = por %p150, %p151
      %p153 = scmp.ne.s32.totalorder %s145, %s147
      %p154 = scmp.eq.s32.totalorder %s18, 1
      %p155 = por %p153, %p154
      %p156 = scmp.ne.s32.totalorder %s147, %s148
      %p157 = scmp.eq.s32.totalorder %s18, 0
      %p158 = por %p156, %p157
      %p159 = scmp.ne.s32.totalorder %s147, %s148
      %p160 = scmp.eq.s32.totalorder %s19, 1
      %p161 = por %p159, %p160
      %p163 = scmp.ne.s32.totalorder %s148, %s162
      %p164 = scmp.eq.s32.totalorder %s19, 0
      %p165 = por %p163, %p164
      %s166 = ssub.s32 %s20, %s32
      %p167 = scmp.eq.s32.totalorder %s166, 0
      %s169 = sadd.s32 %s168, 1
      %s170 = scalar_select %p167, %s168, %s169
      %p173 = pneg %p167
      %p174 = scmp.eq.s32.totalorder %s13, 1
      %p175 = por %p173, %p174
      %p176 = scmp.ne.s32.totalorder %s168, %s171
      %p177 = scmp.eq.s32.totalorder %s13, 0
      %p178 = por %p176, %p177
      %p179 = scmp.ne.s32.totalorder %s168, %s171
      %p180 = scmp.eq.s32.totalorder %s18, 1
      %p181 = por %p179, %p180
      %p182 = scmp.ne.s32.totalorder %s171, %s172
      %p183 = scmp.eq.s32.totalorder %s18, 0
      %p184 = por %p182, %p183
      %p185 = scmp.ne.s32.totalorder %s171, %s172
      %p186 = scmp.eq.s32.totalorder %s19, 1
      %p187 = por %p185, %p186
      %p189 = scmp.ne.s32.totalorder %s172, %s188
      %p190 = scmp.eq.s32.totalorder %s19, 0
      %p191 = por %p189, %p190
      %p192 = scmp.le.s32.totalorder 1, %s13
      %p193 = scmp.lt.s32.totalorder %s13, 3
      %p194 = pnand %p192, %p193
      %p195 = pneg %p194
      // Predicated region
      $region9: #{textcnn_forward.1} parent=5 // pred_check
        _
      $region10: #{textcnn_forward.1} parent=5 // pred_check_branch
        %197 = sbr.rel (%p194) target = $region12
      $region11: #{textcnn_forward.1} parent=5 // pred_region
        %s198 = ssub.s32 %s13, 1
        // Predicated region
        $region13: #{textcnn_forward.1} parent=11 // pred_check
          %p199 = pneg %p74
        $region14: #{textcnn_forward.1} parent=11 // pred_check_branch
          %201 = sbr.rel (%p199) target = $region16
        $region15: #{textcnn_forward.1} parent=11 // pred_region
          %s203 = ssub.s32 1280, 1280
          %204 = vsyncadd [#allocation6], %s203
          %s205 = sshll.u32 [#allocation5], 4
          %s206 = int_to_ptr.vmem [resolvable:$true] %s205
          %211 = dma.hbm_to_vmem [thread:$0]  %s1, 1280, %s206, [#allocation6], 64, 64, 4
        $region16: #{textcnn_forward.1} parent=11 // pred_fallthru
          _
        // Predicated region
        $region17: #{textcnn_forward.1} parent=11 // pred_check
          %p212 = pneg %p95
        $region18: #{textcnn_forward.1} parent=11 // pred_check_branch
          %214 = sbr.rel (%p212) target = $region20
        $region19: #{textcnn_forward.1} parent=11 // pred_region
          _
        $region20: #{textcnn_forward.1} parent=11 // pred_fallthru
          _
        // Predicated region
        $region21: #{textcnn_forward.1} parent=11 // pred_check
          %p215 = pneg %p116
        $region22: #{textcnn_forward.1} parent=11 // pred_check_branch
          %217 = sbr.rel (%p215) target = $region24
        $region23: #{textcnn_forward.1} parent=11 // pred_region
          _
        $region24: #{textcnn_forward.1} parent=11 // pred_fallthru
          _
        // Predicated region
        $region25: #{textcnn_forward.1} parent=11 // pred_check
          %p218 = pneg %p137
        $region26: #{textcnn_forward.1} parent=11 // pred_check_branch
          %220 = sbr.rel (%p218) target = $region28
        $region27: #{textcnn_forward.1} parent=11 // pred_region
          _
        $region28: #{textcnn_forward.1} parent=11 // pred_fallthru
          _
        // Predicated region
        $region29: #{textcnn_forward.1} parent=11 // pred_check
          %p221 = pneg %p158
        $region30: #{textcnn_forward.1} parent=11 // pred_check_branch
          %223 = sbr.rel (%p221) target = $region32
        $region31: #{textcnn_forward.1} parent=11 // pred_region
          _
        $region32: #{textcnn_forward.1} parent=11 // pred_fallthru
          _
      $region12: #{textcnn_forward.1} parent=5 // pred_fallthru
        _
      %p224 = scmp.lt.s32.totalorder %s13, 2
      // Predicated region
      $region33: #{textcnn_forward.1} parent=5 // pred_check
        %p225 = pneg %p224
      $region34: #{textcnn_forward.1} parent=5 // pred_check_branch
        %227 = sbr.rel (%p225) target = $region36
      $region35: #{textcnn_forward.1} parent=5 // pred_region
        // Predicated region
        $region37: #{textcnn_forward.1} parent=35 // pred_check
          %p228 = pneg %p47
        $region38: #{textcnn_forward.1} parent=35 // pred_check_branch
          %230 = sbr.rel (%p228) target = $region40
        $region39: #{textcnn_forward.1} parent=35 // pred_region
          %s231 = sand.u32 %s37, 1
          %s232 = sand.u32 %s37, 1
          %s233 = smul.addr %s232, 64
          %s234 = scalar_lea.vmem [#allocation4], %s233
          %s235 = smul.u32 8, %s20
          %s236 = smul.u32 2, %s21
          %s237 = smul.addr %s235, 4
          %s238 = sadd.s32 %s236, %s237
          %s239 = smul.addr %s238, 4
          %s240 = scalar_lea.vmem %s0, %s239
          // Predicated region
          $region41: #{textcnn_forward.1} parent=39 // pred_check
            _
          $region42: #{textcnn_forward.1} parent=39 // pred_check_branch
            %242 = sbr.rel (0) target = $region44
          $region43: #{textcnn_forward.1} parent=39 // pred_region
            // Predicated region
            $region45: #{textcnn_forward.1} parent=43 // pred_check
              _
            $region46: #{textcnn_forward.1} parent=43 // pred_check_branch
              %244 = sbr.rel target = $region48
            $region47: #{textcnn_forward.1} parent=43 // pred_region
              // Predicated region
              $region60: #{textcnn_forward.1} parent=47 // pred_check
                _
              $region61: #{textcnn_forward.1} parent=47 // pred_check_branch
                %290 = sbr.rel (0) target = $region63
              $region62: #{textcnn_forward.1} parent=47 // pred_region
                loop: start=0, step=1, limit=1
                $region64: #{textcnn_forward.1} parent=62 // loop_pre_header
                  _
                $region65: #{textcnn_forward.1} parent=62 // loop_header
                  %s292 = sphi 0, %s296
                  %p293 = scmp.ge.s32.totalorder %s292, 1
                  %s297 = sphi %s240, %s240
                  %s298 = sphi %s234, %s234
                $region66: #{textcnn_forward.1} parent=62 // loop_header_branch
                  %295 = sbr.rel (%p293) target = $region70
                $region67: #{textcnn_forward.1} parent=62 // loop_body
                  _
                $region68: #{textcnn_forward.1} parent=62 // loop_footer
                  %s296 = sadd.s32 1, %s292
                $region69: #{textcnn_forward.1} parent=62 // loop_footer_branch
                  %291 = sbr.rel target = $region65
                $region70: #{textcnn_forward.1} parent=62 // loop_exit
                  _
                %s300 = ssub.s32 16, 1
                loop: start=0, step=1, limit=1
                $region71: #{textcnn_forward.1} parent=62 // loop_pre_header
                  _
                $region72: #{textcnn_forward.1} parent=62 // loop_header
                  %s302 = sphi 0, %s306
                  %p303 = scmp.ge.s32.totalorder %s302, 1
                  %s307 = sphi %s240, %s240
                  %s308 = sphi %s234, %s234
                $region73: #{textcnn_forward.1} parent=62 // loop_header_branch
                  %305 = sbr.rel (%p303) target = $region77
                $region74: #{textcnn_forward.1} parent=62 // loop_body
                  %v309 = vld [vmem:[%s307] sm:%s300]
                  %310 = vst [vmem:[%s308] sm:%s300] %v309
                  %v311 = vld [vmem:[%s307 + $0x4] sm:%s300]
                  %312 = vst [vmem:[%s308 + $0x4] sm:%s300] %v311
                  %v313 = vld [vmem:[%s307 + $0x10] sm:%s300]
                  %314 = vst [vmem:[%s308 + $0x8] sm:%s300] %v313
                  %v315 = vld [vmem:[%s307 + $0x14] sm:%s300]
                  %316 = vst [vmem:[%s308 + $0xc] sm:%s300] %v315
                  %v317 = vld [vmem:[%s307 + $0x20] sm:%s300]
                  %318 = vst [vmem:[%s308 + $0x10] sm:%s300] %v317
                  %v319 = vld [vmem:[%s307 + $0x24] sm:%s300]
                  %320 = vst [vmem:[%s308 + $0x14] sm:%s300] %v319
                  %v321 = vld [vmem:[%s307 + $0x30] sm:%s300]
                  %322 = vst [vmem:[%s308 + $0x18] sm:%s300] %v321
                  %v323 = vld [vmem:[%s307 + $0x34] sm:%s300]
                  %324 = vst [vmem:[%s308 + $0x1c] sm:%s300] %v323
                  %v325 = vld [vmem:[%s307 + $0x40] sm:%s300]
                  %326 = vst [vmem:[%s308 + $0x20] sm:%s300] %v325
                  %v327 = vld [vmem:[%s307 + $0x44] sm:%s300]
                  %328 = vst [vmem:[%s308 + $0x24] sm:%s300] %v327
                  %v329 = vld [vmem:[%s307 + $0x50] sm:%s300]
                  %330 = vst [vmem:[%s308 + $0x28] sm:%s300] %v329
                  %v331 = vld [vmem:[%s307 + $0x54] sm:%s300]
                  %332 = vst [vmem:[%s308 + $0x2c] sm:%s300] %v331
                  %v333 = vld [vmem:[%s307 + $0x60] sm:%s300]
                  %334 = vst [vmem:[%s308 + $0x30] sm:%s300] %v333
                  %v335 = vld [vmem:[%s307 + $0x64] sm:%s300]
                  %336 = vst [vmem:[%s308 + $0x34] sm:%s300] %v335
                  %v337 = vld [vmem:[%s307 + $0x70] sm:%s300]
                  %338 = vst [vmem:[%s308 + $0x38] sm:%s300] %v337
                  %v339 = vld [vmem:[%s307 + $0x74] sm:%s300]
                  %340 = vst [vmem:[%s308 + $0x3c] sm:%s300] %v339
                $region75: #{textcnn_forward.1} parent=62 // loop_footer
                  %s306 = sadd.s32 1, %s302
                $region76: #{textcnn_forward.1} parent=62 // loop_footer_branch
                  %301 = sbr.rel target = $region72
                $region77: #{textcnn_forward.1} parent=62 // loop_exit
                  _
              $region63: #{textcnn_forward.1} parent=47 // pred_fallthru
                _
            $region48: #{textcnn_forward.1} parent=43 // pred_fallthru
              _
            // Predicated region
            $region49: #{textcnn_forward.1} parent=43 // pred_check
              _
            $region50: #{textcnn_forward.1} parent=43 // pred_check_branch
              %246 = sbr.rel (0) target = $region52
            $region51: #{textcnn_forward.1} parent=43 // pred_region
              %s248 = ssub.s32 16, 1
              loop: start=0, step=1, limit=1
              $region53: #{textcnn_forward.1} parent=51 // loop_pre_header
                _
              $region54: #{textcnn_forward.1} parent=51 // loop_header
                %s250 = sphi 0, %s254
                %p251 = scmp.ge.s32.totalorder %s250, 1
                %s255 = sphi %s240, %s240
                %s256 = sphi %s234, %s234
              $region55: #{textcnn_forward.1} parent=51 // loop_header_branch
                %253 = sbr.rel (%p251) target = $region59
              $region56: #{textcnn_forward.1} parent=51 // loop_body
                %v257 = vld [vmem:[%s255] sm:%s248]
                %258 = vst [vmem:[%s256] sm:%s248] %v257
                %v259 = vld [vmem:[%s255 + $0x4] sm:%s248]
                %260 = vst [vmem:[%s256 + $0x4] sm:%s248] %v259
                %v261 = vld [vmem:[%s255 + $0x10] sm:%s248]
                %262 = vst [vmem:[%s256 + $0x8] sm:%s248] %v261
                %v263 = vld [vmem:[%s255 + $0x14] sm:%s248]
                %264 = vst [vmem:[%s256 + $0xc] sm:%s248] %v263
                %v265 = vld [vmem:[%s255 + $0x20] sm:%s248]
                %266 = vst [vmem:[%s256 + $0x10] sm:%s248] %v265
                %v267 = vld [vmem:[%s255 + $0x24] sm:%s248]
                %268 = vst [vmem:[%s256 + $0x14] sm:%s248] %v267
                %v269 = vld [vmem:[%s255 + $0x30] sm:%s248]
                %270 = vst [vmem:[%s256 + $0x18] sm:%s248] %v269
                %v271 = vld [vmem:[%s255 + $0x34] sm:%s248]
                %272 = vst [vmem:[%s256 + $0x1c] sm:%s248] %v271
                %v273 = vld [vmem:[%s255 + $0x40] sm:%s248]
                %274 = vst [vmem:[%s256 + $0x20] sm:%s248] %v273
                %v275 = vld [vmem:[%s255 + $0x44] sm:%s248]
                %276 = vst [vmem:[%s256 + $0x24] sm:%s248] %v275
                %v277 = vld [vmem:[%s255 + $0x50] sm:%s248]
                %278 = vst [vmem:[%s256 + $0x28] sm:%s248] %v277
                %v279 = vld [vmem:[%s255 + $0x54] sm:%s248]
                %280 = vst [vmem:[%s256 + $0x2c] sm:%s248] %v279
                %v281 = vld [vmem:[%s255 + $0x60] sm:%s248]
                %282 = vst [vmem:[%s256 + $0x30] sm:%s248] %v281
                %v283 = vld [vmem:[%s255 + $0x64] sm:%s248]
                %284 = vst [vmem:[%s256 + $0x34] sm:%s248] %v283
                %v285 = vld [vmem:[%s255 + $0x70] sm:%s248]
                %286 = vst [vmem:[%s256 + $0x38] sm:%s248] %v285
                %v287 = vld [vmem:[%s255 + $0x74] sm:%s248]
                %288 = vst [vmem:[%s256 + $0x3c] sm:%s248] %v287
              $region57: #{textcnn_forward.1} parent=51 // loop_footer
                %s254 = sadd.s32 1, %s250
              $region58: #{textcnn_forward.1} parent=51 // loop_footer_branch
                %249 = sbr.rel target = $region54
              $region59: #{textcnn_forward.1} parent=51 // loop_exit
                _
            $region52: #{textcnn_forward.1} parent=43 // pred_fallthru
              _
          $region44: #{textcnn_forward.1} parent=39 // pred_fallthru
            _
          %341 = vnop
        $region40: #{textcnn_forward.1} parent=35 // pred_fallthru
          _
      $region36: #{textcnn_forward.1} parent=5 // pred_fallthru
        _
      %p342 = scmp.le.s32.totalorder 1, %s13
      %p343 = scmp.lt.s32.totalorder %s13, 3
      %p344 = pnand %p342, %p343
      %p345 = pneg %p344
      // Predicated region
      $region78: #{textcnn_forward.1} parent=5 // pred_check
        _
      $region79: #{textcnn_forward.1} parent=5 // pred_check_branch
        %347 = sbr.rel (%p344) target = $region81
      $region80: #{textcnn_forward.1} parent=5 // pred_region
        %s348 = ssub.s32 %s13, 1
        %s349 = sand.u32 %s40, 1
        %s350 = sand.u32 %s40, 1
        %s351 = smul.addr %s350, 64
        %s352 = scalar_lea.vmem [#allocation4], %s351
        // Predicated region
        $region82: #{textcnn_forward.1} parent=80 // pred_check
          %p353 = pneg %p53
        $region83: #{textcnn_forward.1} parent=80 // pred_check_branch
          %355 = sbr.rel (%p353) target = $region85
        $region84: #{textcnn_forward.1} parent=80 // pred_region
          _
        $region85: #{textcnn_forward.1} parent=80 // pred_fallthru
          _
        // Predicated region
        $region86: #{textcnn_forward.1} parent=80 // pred_check
          %p356 = pneg %p74
        $region87: #{textcnn_forward.1} parent=80 // pred_check_branch
          %358 = sbr.rel (%p356) target = $region89
        $region88: #{textcnn_forward.1} parent=80 // pred_region
          %359 = dma.done [#allocation6], 1280
        $region89: #{textcnn_forward.1} parent=80 // pred_fallthru
          _
        %s360 = sand.u32 %s40, 1
        %s361 = sand.u32 %s40, 1
        %s362 = smul.addr %s361, 64
        %s363 = scalar_lea.vmem [#allocation4], %s362
        %p364 = pneg %p53
        %p365 = pneg %p50
        %p366 = pneg %p74
        %p367 = pneg %p71
        %p368 = pneg %p95
        %p369 = pneg %p92
        %p370 = pneg %p116
        %p371 = pneg %p113
        %p372 = pneg %p137
        %p373 = pneg %p134
        %p374 = pneg %p158
        %p375 = pneg %p155
        %p376 = pneg %p184
        %p377 = pneg %p181
        %p378 = scmp.lt.s32.totalorder %s22, 0
        %s379 = scalar_select %p378, %s22, 0
        %s380 = smul.addr %s379, 8
        %s381 = scalar_lea.vmem %s6, %s380
        %s382 = smul.u32 8, %s22
        %s383 = smul.u32 2, %s23
        %p384 = scmp.lt.s32.totalorder %s22, 0
        %s385 = scalar_select %p384, %s22, 0
        %s386 = smul.addr %s385, 8
        %s387 = scalar_lea.vmem %s6, %s386
        %p389 = scmp.eq.s32.totalorder %s23, 0
        // Predicated region
        $region90: #{textcnn_forward.1} parent=80 // pred_check
          %p390 = pneg %p389
        $region91: #{textcnn_forward.1} parent=80 // pred_check_branch
          %392 = sbr.rel (%p390) target = $region93
        $region92: #{textcnn_forward.1} parent=80 // pred_region
          %vm393 = vcmask 254976
          %394 = vst.msk [vmem:[#allocation2] sm:$0x3] %vm393, 0
          %395 = vst.msk [vmem:[#allocation2 + $0xc] sm:$0x3] %vm393, 0
          %396 = vst.msk [vmem:[#allocation2 + $0x18] sm:$0x3] %vm393, 0
          %397 = vst.msk [vmem:[#allocation2 + $0x24] sm:$0x3] %vm393, 0
          %398 = vst.msk [vmem:[#allocation2 + $0x30] sm:$0x3] %vm393, 0
          %399 = vst.msk [vmem:[#allocation2 + $0x3c] sm:$0x3] %vm393, 0
          %400 = vst.msk [vmem:[#allocation2 + $0x48] sm:$0x3] %vm393, 0
          %401 = vst.msk [vmem:[#allocation2 + $0x54] sm:$0x3] %vm393, 0
          %402 = vst [vmem:[#allocation3] sm:$0xff] -inf
        $region93: #{textcnn_forward.1} parent=80 // pred_fallthru
          _
        %v403 = vld [vmem:[%s352] sm:$0xf]
        %v404 = vld [vmem:[%s352 + $0x4] sm:$0xf]
        %v405 = vld [vmem:[%s352 + $0x8] sm:$0xf]
        %v406 = vld [vmem:[%s352 + $0xc] sm:$0xf]
        %v407 = vld [vmem:[%s352 + $0x10] sm:$0xf]
        %v408 = vld [vmem:[%s352 + $0x14] sm:$0xf]
        %v409 = vld [vmem:[%s352 + $0x18] sm:$0xf]
        %v410 = vld [vmem:[%s352 + $0x1c] sm:$0xf]
        %v411 = vld [vmem:[%s352 + $0x20] sm:$0xf]
        %v412 = vld [vmem:[%s352 + $0x24] sm:$0xf]
        %v413 = vld [vmem:[%s352 + $0x28] sm:$0xf]
        %v414 = vld [vmem:[%s352 + $0x2c] sm:$0xf]
        %v415 = vld [vmem:[%s352 + $0x30] sm:$0xf]
        %v416 = vld [vmem:[%s352 + $0x34] sm:$0xf]
        %v417 = vld [vmem:[%s352 + $0x38] sm:$0xf]
        %v418 = vld [vmem:[%s352 + $0x3c] sm:$0xf]
        %vm435 = vcmask 1041408
        %vm436 = vcmask 1045508
        %vm437 = vmor %vm435, %vm436
        %v438 = vrot.slane %v403, 6
        %v439 = vrot.slane %v438, 4
        %v440 = vrot.slane %v404, 6
        %v441 = vsel %vm437, %v439, %v440
        %v442 = vrot.slane %v440, 4
        %v443 = vrot.slane %v405, 6
        %v444 = vrot.slane %v443, 4
        %v445 = vrot.slane %v406, 6
        %v446 = vsel %vm437, %v444, %v445
        %v447 = vrot.slane %v445, 4
        %v448 = vrot.slane %v407, 6
        %v449 = vrot.slane %v448, 4
        %v450 = vrot.slane %v408, 6
        %v451 = vsel %vm437, %v449, %v450
        %v452 = vrot.slane %v450, 4
        %v453 = vrot.slane %v409, 6
        %v454 = vrot.slane %v453, 4
        %v455 = vrot.slane %v410, 6
        %v456 = vsel %vm437, %v454, %v455
        %v457 = vrot.slane %v455, 4
        %v458 = vrot.slane %v411, 6
        %v459 = vrot.slane %v458, 4
        %v460 = vrot.slane %v412, 6
        %v461 = vsel %vm437, %v459, %v460
        %v462 = vrot.slane %v460, 4
        %v463 = vrot.slane %v413, 6
        %v464 = vrot.slane %v463, 4
        %v465 = vrot.slane %v414, 6
        %v466 = vsel %vm437, %v464, %v465
        %v467 = vrot.slane %v465, 4
        %v468 = vrot.slane %v415, 6
        %v469 = vrot.slane %v468, 4
        %v470 = vrot.slane %v416, 6
        %v471 = vsel %vm437, %v469, %v470
        %v472 = vrot.slane %v470, 4
        %v473 = vrot.slane %v417, 6
        %v474 = vrot.slane %v473, 4
        %v475 = vrot.slane %v418, 6
        %v476 = vsel %vm437, %v474, %v475
        %v477 = vrot.slane %v475, 4
        %vm502 = vcmask 257026
        %503 = vst.msk [vmem:[#allocation2] sm:$0xc] %vm502, %v438
        %vm504 = vcmask 257024
        %505 = vst.msk [vmem:[#allocation2 + $0x4] sm:$0xf] %vm504, %v441
        %vm506 = vcmask 254976
        %507 = vst.msk [vmem:[#allocation2 + $0x8] sm:$0x3] %vm506, %v442
        %508 = vst.msk [vmem:[#allocation2 + $0xc] sm:$0xc] %vm502, %v443
        %509 = vst.msk [vmem:[#allocation2 + $0x10] sm:$0xf] %vm504, %v446
        %510 = vst.msk [vmem:[#allocation2 + $0x14] sm:$0x3] %vm506, %v447
        %511 = vst.msk [vmem:[#allocation2 + $0x18] sm:$0xc] %vm502, %v448
        %512 = vst.msk [vmem:[#allocation2 + $0x1c] sm:$0xf] %vm504, %v451
        %513 = vst.msk [vmem:[#allocation2 + $0x20] sm:$0x3] %vm506, %v452
        %514 = vst.msk [vmem:[#allocation2 + $0x24] sm:$0xc] %vm502, %v453
        %515 = vst.msk [vmem:[#allocation2 + $0x28] sm:$0xf] %vm504, %v456
        %516 = vst.msk [vmem:[#allocation2 + $0x2c] sm:$0x3] %vm506, %v457
        %517 = vst.msk [vmem:[#allocation2 + $0x30] sm:$0xc] %vm502, %v458
        %518 = vst.msk [vmem:[#allocation2 + $0x34] sm:$0xf] %vm504, %v461
        %519 = vst.msk [vmem:[#allocation2 + $0x38] sm:$0x3] %vm506, %v462
        %520 = vst.msk [vmem:[#allocation2 + $0x3c] sm:$0xc] %vm502, %v463
        %521 = vst.msk [vmem:[#allocation2 + $0x40] sm:$0xf] %vm504, %v466
        %522 = vst.msk [vmem:[#allocation2 + $0x44] sm:$0x3] %vm506, %v467
        %523 = vst.msk [vmem:[#allocation2 + $0x48] sm:$0xc] %vm502, %v468
        %524 = vst.msk [vmem:[#allocation2 + $0x4c] sm:$0xf] %vm504, %v471
        %525 = vst.msk [vmem:[#allocation2 + $0x50] sm:$0x3] %vm506, %v472
        %526 = vst.msk [vmem:[#allocation2 + $0x54] sm:$0xc] %vm502, %v473
        %527 = vst.msk [vmem:[#allocation2 + $0x58] sm:$0xf] %vm504, %v476
        %528 = vst.msk [vmem:[#allocation2 + $0x5c] sm:$0x3] %vm506, %v477
        %v529 = vld [vmem:[#allocation2] sm:$0xf]
        %v530 = vld [vmem:[#allocation2 + $0x4] sm:$0xf]
        %v531 = vld [vmem:[#allocation2 + $0xc] sm:$0xf]
        %v532 = vld [vmem:[#allocation2 + $0x10] sm:$0xf]
        %v533 = vld [vmem:[#allocation2 + $0x18] sm:$0xf]
        %v534 = vld [vmem:[#allocation2 + $0x1c] sm:$0xf]
        %v535 = vld [vmem:[#allocation2 + $0x24] sm:$0xf]
        %v536 = vld [vmem:[#allocation2 + $0x28] sm:$0xf]
        %v537 = vld [vmem:[#allocation2 + $0x30] sm:$0xf]
        %v538 = vld [vmem:[#allocation2 + $0x34] sm:$0xf]
        %v539 = vld [vmem:[#allocation2 + $0x3c] sm:$0xf]
        %v540 = vld [vmem:[#allocation2 + $0x40] sm:$0xf]
        %v541 = vld [vmem:[#allocation2 + $0x48] sm:$0xf]
        %v542 = vld [vmem:[#allocation2 + $0x4c] sm:$0xf]
        %v543 = vld [vmem:[#allocation2 + $0x54] sm:$0xf]
        %v544 = vld [vmem:[#allocation2 + $0x58] sm:$0xf]
        %v545 = vld [vmem:[#allocation5] sm:$0xf]
        %v546 = vld [vmem:[#allocation5 + $0x4] sm:$0xf]
        %v547 = vld [vmem:[#allocation5 + $0x8] sm:$0xf]
        %v548 = vld [vmem:[#allocation5 + $0xc] sm:$0xf]
        %v549 = vld [vmem:[#allocation2 + $0x8] sm:$0x1]
        %v550 = vld [vmem:[#allocation2 + $0x14] sm:$0x1]
        %v551 = vld [vmem:[#allocation2 + $0x20] sm:$0x1]
        %v552 = vld [vmem:[#allocation2 + $0x2c] sm:$0x1]
        %v553 = vld [vmem:[#allocation2 + $0x38] sm:$0x1]
        %v554 = vld [vmem:[#allocation2 + $0x44] sm:$0x1]
        %v555 = vld [vmem:[#allocation2 + $0x50] sm:$0x1]
        %v556 = vld [vmem:[#allocation2 + $0x5c] sm:$0x1]
        %vm557 = vsmask.f32 3328
        %vm558 = vsmask.f32 7440
        %vm559 = vmor %vm557, %vm558
        %v561 = vshrl.u32 %v529, 16
        %v563 = vrot.slane %v561, 4
        %v564 = vshll.u32 %v529, 16
        %v566 = vrot.slane %v564, 5
        %v567 = vor.u32 %v563, %v566
        %v568 = vrot.slane %v567, 4
        %v570 = vshll.u32 %v530, 16
        %v572 = vrot.slane %v570, 5
        %v573 = vsel %vm559, %v568, %v572
        %v574 = vshrl.u32 %v530, 16
        %v576 = vrot.slane %v574, 4
        %v577 = vor.u32 %v576, %v572
        %v578 = vrot.slane %v577, 4
        %v580 = vshll.u32 %v549, 16
        %v582 = vrot.slane %v580, 5
        %v583 = vsel %vm559, %v578, %v582
        %v585 = vshrl.u32 %v531, 16
        %v587 = vrot.slane %v585, 4
        %v588 = vshll.u32 %v531, 16
        %v590 = vrot.slane %v588, 5
        %v591 = vor.u32 %v587, %v590
        %v592 = vrot.slane %v591, 4
        %v594 = vshll.u32 %v532, 16
        %v596 = vrot.slane %v594, 5
        %v597 = vsel %vm559, %v592, %v596
        %v598 = vshrl.u32 %v532, 16
        %v600 = vrot.slane %v598, 4
        %v601 = vor.u32 %v600, %v596
        %v602 = vrot.slane %v601, 4
        %v604 = vshll.u32 %v550, 16
        %v606 = vrot.slane %v604, 5
        %v607 = vsel %vm559, %v602, %v606
        %v609 = vshrl.u32 %v533, 16
        %v611 = vrot.slane %v609, 4
        %v612 = vshll.u32 %v533, 16
        %v614 = vrot.slane %v612, 5
        %v615 = vor.u32 %v611, %v614
        %v616 = vrot.slane %v615, 4
        %v618 = vshll.u32 %v534, 16
        %v620 = vrot.slane %v618, 5
        %v621 = vsel %vm559, %v616, %v620
        %v622 = vshrl.u32 %v534, 16
        %v624 = vrot.slane %v622, 4
        %v625 = vor.u32 %v624, %v620
        %v626 = vrot.slane %v625, 4
        %v628 = vshll.u32 %v551, 16
        %v630 = vrot.slane %v628, 5
        %v631 = vsel %vm559, %v626, %v630
        %v633 = vshrl.u32 %v535, 16
        %v635 = vrot.slane %v633, 4
        %v636 = vshll.u32 %v535, 16
        %v638 = vrot.slane %v636, 5
        %v639 = vor.u32 %v635, %v638
        %v640 = vrot.slane %v639, 4
        %v642 = vshll.u32 %v536, 16
        %v644 = vrot.slane %v642, 5
        %v645 = vsel %vm559, %v640, %v644
        %v646 = vshrl.u32 %v536, 16
        %v648 = vrot.slane %v646, 4
        %v649 = vor.u32 %v648, %v644
        %v650 = vrot.slane %v649, 4
        %v652 = vshll.u32 %v552, 16
        %v654 = vrot.slane %v652, 5
        %v655 = vsel %vm559, %v650, %v654
        %v657 = vshrl.u32 %v537, 16
        %v659 = vrot.slane %v657, 4
        %v660 = vshll.u32 %v537, 16
        %v662 = vrot.slane %v660, 5
        %v663 = vor.u32 %v659, %v662
        %v664 = vrot.slane %v663, 4
        %v666 = vshll.u32 %v538, 16
        %v668 = vrot.slane %v666, 5
        %v669 = vsel %vm559, %v664, %v668
        %v670 = vshrl.u32 %v538, 16
        %v672 = vrot.slane %v670, 4
        %v673 = vor.u32 %v672, %v668
        %v674 = vrot.slane %v673, 4
        %v676 = vshll.u32 %v553, 16
        %v678 = vrot.slane %v676, 5
        %v679 = vsel %vm559, %v674, %v678
        %v681 = vshrl.u32 %v539, 16
        %v683 = vrot.slane %v681, 4
        %v684 = vshll.u32 %v539, 16
        %v686 = vrot.slane %v684, 5
        %v687 = vor.u32 %v683, %v686
        %v688 = vrot.slane %v687, 4
        %v690 = vshll.u32 %v540, 16
        %v692 = vrot.slane %v690, 5
        %v693 = vsel %vm559, %v688, %v692
        %v694 = vshrl.u32 %v540, 16
        %v696 = vrot.slane %v694, 4
        %v697 = vor.u32 %v696, %v692
        %v698 = vrot.slane %v697, 4
        %v700 = vshll.u32 %v554, 16
        %v702 = vrot.slane %v700, 5
        %v703 = vsel %vm559, %v698, %v702
        %v705 = vshrl.u32 %v541, 16
        %v707 = vrot.slane %v705, 4
        %v708 = vshll.u32 %v541, 16
        %v710 = vrot.slane %v708, 5
        %v711 = vor.u32 %v707, %v710
        %v712 = vrot.slane %v711, 4
        %v714 = vshll.u32 %v542, 16
        %v716 = vrot.slane %v714, 5
        %v717 = vsel %vm559, %v712, %v716
        %v718 = vshrl.u32 %v542, 16
        %v720 = vrot.slane %v718, 4
        %v721 = vor.u32 %v720, %v716
        %v722 = vrot.slane %v721, 4
        %v724 = vshll.u32 %v555, 16
        %v726 = vrot.slane %v724, 5
        %v727 = vsel %vm559, %v722, %v726
        %v729 = vshrl.u32 %v543, 16
        %v731 = vrot.slane %v729, 4
        %v732 = vshll.u32 %v543, 16
        %v734 = vrot.slane %v732, 5
        %v735 = vor.u32 %v731, %v734
        %v736 = vrot.slane %v735, 4
        %v738 = vshll.u32 %v544, 16
        %v740 = vrot.slane %v738, 5
        %v741 = vsel %vm559, %v736, %v740
        %v742 = vshrl.u32 %v544, 16
        %v744 = vrot.slane %v742, 4
        %v745 = vor.u32 %v744, %v740
        %v746 = vrot.slane %v745, 4
        %v748 = vshll.u32 %v556, 16
        %v750 = vrot.slane %v748, 5
        %v751 = vsel %vm559, %v746, %v750
        %s752 = scalar_lea.vmem [#allocation5], 16
        %v753 = vld [vmem:[%s752] sm:$0xf]
        %v754 = vld [vmem:[%s752 + $0x4] sm:$0xf]
        %v755 = vld [vmem:[%s752 + $0x8] sm:$0xf]
        %v756 = vld [vmem:[%s752 + $0xc] sm:$0xf]
        %v757 = vunpack.c.l.b16 %v573
        %v758 = vunpack.c.l.b16 %v583
        %v759 = vunpack.c.l.b16 %v597
        %v760 = vunpack.c.l.b16 %v607
        %v761 = vunpack.c.l.b16 %v621
        %v762 = vunpack.c.l.b16 %v631
        %v763 = vunpack.c.l.b16 %v645
        %v764 = vunpack.c.l.b16 %v655
        %v765 = vunpack.c.l.b16 %v669
        %v766 = vunpack.c.l.b16 %v679
        %v767 = vunpack.c.l.b16 %v693
        %v768 = vunpack.c.l.b16 %v703
        %v769 = vunpack.c.l.b16 %v717
        %v770 = vunpack.c.l.b16 %v727
        %v771 = vunpack.c.l.b16 %v741
        %v772 = vunpack.c.l.b16 %v751
        %v773 = vpack.c.b16 %v758, %v757
        %v774 = vpack.c.b16 %v760, %v759
        %v775 = vpack.c.b16 %v762, %v761
        %v776 = vpack.c.b16 %v764, %v763
        %v777 = vpack.c.b16 %v766, %v765
        %v778 = vpack.c.b16 %v768, %v767
        %v779 = vpack.c.b16 %v770, %v769
        %v780 = vpack.c.b16 %v772, %v771
        %v785 = vunpack.c.l.b16 %v753
        %v786 = vunpack.c.l.b16 %v754
        %v787 = vunpack.c.l.b16 %v755
        %v788 = vunpack.c.l.b16 %v756
        %v789 = vpack.c.b16 %v786, %v785
        %v790 = vpack.c.b16 %v788, %v787
        %vm793 = vcmask 261120
        %v795 = vsel %vm793, %v773, 0
        %v798 = vsel %vm793, %v774, 0
        %v801 = vsel %vm793, %v775, 0
        %v804 = vsel %vm793, %v776, 0
        %v807 = vsel %vm793, %v777, 0
        %v810 = vsel %vm793, %v778, 0
        %v813 = vsel %vm793, %v779, 0
        %v816 = vsel %vm793, %v780, 0
        %818 = vmatprep.subr.bf16.mxu0 0
        %819 = vmatpush1.bf16.msra.mxu0 0
        %820 = vmatprep.subr.bf16.mxu0 0
        %821 = vmatpush1.bf16.msra.mxu0 0
        %822 = vmatprep.subr.bf16.mxu0 0
        %823 = vmatpush1.bf16.msra.mxu0 0
        %824 = vmatprep.subr.bf16.mxu0 0
        %825 = vmatpush1.bf16.msra.mxu0 0
        %826 = vmatprep.subr.bf16.mxu0 0
        %827 = vmatpush1.bf16.msra.mxu0 0
        %828 = vmatprep.subr.bf16.mxu0 0
        %829 = vmatpush1.bf16.msra.mxu0 0
        %830 = vmatprep.subr.bf16.mxu0 0
        %831 = vmatpush1.bf16.msra.mxu0 %v790
        %832 = vmatprep.subr.bf16.mxu0 0
        %833 = vmatpush1.bf16.msra.mxu0 %v789
        %834 = vmatprep.subr.bf16.mxu0 0
        %835 = vmatpush2.bf16.msra.mxu0 0
        %836 = vmatprep.subr.bf16.mxu0 0
        %837 = vmatpush2.bf16.msra.mxu0 0
        %838 = vmatprep.subr.bf16.mxu0 0
        %839 = vmatpush2.bf16.msra.mxu0 0
        %840 = vmatprep.subr.bf16.mxu0 0
        %841 = vmatpush2.bf16.msra.mxu0 0
        %842 = vmatprep.subr.bf16.mxu0 0
        %843 = vmatpush2.bf16.msra.mxu0 0
        %844 = vmatprep.subr.bf16.mxu0 0
        %845 = vmatpush2.bf16.msra.mxu0 0
        %846 = vmatprep.subr.bf16.mxu0 0
        %847 = vmatpush2.bf16.msra.mxu0 0
        %848 = vmatprep.subr.bf16.mxu0 0
        %849 = vmatpush2.bf16.msra.mxu0 0
        %850 = vmatprep.mubr.bf16.mxu0 0
        %851 = vmatmul.mubr.bf16.gmra.mxu0 %v795
        %v852 = vpop.f32.mrf.mxu0
        %v853 = vadd.f32 0.0, %v852
        %v854 = vpop.f32.mrf.mxu0
        %v855 = vpop.f32.mrf.mxu0
        %v856 = vadd.f32 0.0, %v855
        %v857 = vpop.f32.mrf.mxu0
        %858 = vmatprep.mubr.bf16.mxu0 0
        %859 = vmatmul.mubr.bf16.gmra.mxu0 %v798
        %v860 = vpop.f32.mrf.mxu0
        %v861 = vadd.f32 0.0, %v860
        %v862 = vpop.f32.mrf.mxu0
        %v863 = vpop.f32.mrf.mxu0
        %v864 = vadd.f32 0.0, %v863
        %v865 = vpop.f32.mrf.mxu0
        %866 = vmatprep.mubr.bf16.mxu0 0
        %867 = vmatmul.mubr.bf16.gmra.mxu0 %v801
        %v868 = vpop.f32.mrf.mxu0
        %v869 = vadd.f32 0.0, %v868
        %v870 = vpop.f32.mrf.mxu0
        %v871 = vpop.f32.mrf.mxu0
        %v872 = vadd.f32 0.0, %v871
        %v873 = vpop.f32.mrf.mxu0
        %874 = vmatprep.mubr.bf16.mxu0 0
        %875 = vmatmul.mubr.bf16.gmra.mxu0 %v804
        %v876 = vpop.f32.mrf.mxu0
        %v877 = vadd.f32 0.0, %v876
        %v878 = vpop.f32.mrf.mxu0
        %v879 = vpop.f32.mrf.mxu0
        %v880 = vadd.f32 0.0, %v879
        %v881 = vpop.f32.mrf.mxu0
        %882 = vmatprep.mubr.bf16.mxu0 0
        %883 = vmatmul.mubr.bf16.gmra.mxu0 %v807
        %v884 = vpop.f32.mrf.mxu0
        %v885 = vadd.f32 0.0, %v884
        %v886 = vpop.f32.mrf.mxu0
        %v887 = vpop.f32.mrf.mxu0
        %v888 = vadd.f32 0.0, %v887
        %v889 = vpop.f32.mrf.mxu0
        %890 = vmatprep.mubr.bf16.mxu0 0
        %891 = vmatmul.mubr.bf16.gmra.mxu0 %v810
        %v892 = vpop.f32.mrf.mxu0
        %v893 = vadd.f32 0.0, %v892
        %v894 = vpop.f32.mrf.mxu0
        %v895 = vpop.f32.mrf.mxu0
        %v896 = vadd.f32 0.0, %v895
        %v897 = vpop.f32.mrf.mxu0
        %898 = vmatprep.mubr.bf16.mxu0 0
        %899 = vmatmul.mubr.bf16.gmra.mxu0 %v813
        %v900 = vpop.f32.mrf.mxu0
        %v901 = vadd.f32 0.0, %v900
        %v902 = vpop.f32.mrf.mxu0
        %v903 = vpop.f32.mrf.mxu0
        %v904 = vadd.f32 0.0, %v903
        %v905 = vpop.f32.mrf.mxu0
        %906 = vmatprep.mubr.bf16.mxu0 0
        %907 = vmatmul.mubr.bf16.gmra.mxu0 %v816
        %v908 = vpop.f32.mrf.mxu0
        %v909 = vadd.f32 0.0, %v908
        %v910 = vpop.f32.mrf.mxu0
        %v911 = vpop.f32.mrf.mxu0
        %v912 = vadd.f32 0.0, %v911
        %v913 = vpop.f32.mrf.mxu0
        %914 = vdwg.mxu0
        %v931 = vunpack.c.l.b16 %v529
        %v932 = vunpack.c.l.b16 %v530
        %v933 = vunpack.c.l.b16 %v531
        %v934 = vunpack.c.l.b16 %v532
        %v935 = vunpack.c.l.b16 %v533
        %v936 = vunpack.c.l.b16 %v534
        %v937 = vunpack.c.l.b16 %v535
        %v938 = vunpack.c.l.b16 %v536
        %v939 = vunpack.c.l.b16 %v537
        %v940 = vunpack.c.l.b16 %v538
        %v941 = vunpack.c.l.b16 %v539
        %v942 = vunpack.c.l.b16 %v540
        %v943 = vunpack.c.l.b16 %v541
        %v944 = vunpack.c.l.b16 %v542
        %v945 = vunpack.c.l.b16 %v543
        %v946 = vunpack.c.l.b16 %v544
        %v947 = vpack.c.b16 %v932, %v931
        %v948 = vpack.c.b16 %v934, %v933
        %v949 = vpack.c.b16 %v936, %v935
        %v950 = vpack.c.b16 %v938, %v937
        %v951 = vpack.c.b16 %v940, %v939
        %v952 = vpack.c.b16 %v942, %v941
        %v953 = vpack.c.b16 %v944, %v943
        %v954 = vpack.c.b16 %v946, %v945
        %v959 = vunpack.c.l.b16 %v545
        %v960 = vunpack.c.l.b16 %v546
        %v961 = vunpack.c.l.b16 %v547
        %v962 = vunpack.c.l.b16 %v548
        %v963 = vpack.c.b16 %v960, %v959
        %v964 = vpack.c.b16 %v962, %v961
        %v968 = vsel %vm793, %v947, 0
        %v971 = vsel %vm793, %v948, 0
        %v974 = vsel %vm793, %v949, 0
        %v977 = vsel %vm793, %v950, 0
        %v980 = vsel %vm793, %v951, 0
        %v983 = vsel %vm793, %v952, 0
        %v986 = vsel %vm793, %v953, 0
        %v989 = vsel %vm793, %v954, 0
        %991 = vmatprep.subr.bf16.mxu0 0
        %992 = vmatpush1.bf16.msra.mxu0 0
        %993 = vmatprep.subr.bf16.mxu0 0
        %994 = vmatpush1.bf16.msra.mxu0 0
        %995 = vmatprep.subr.bf16.mxu0 0
        %996 = vmatpush1.bf16.msra.mxu0 0
        %997 = vmatprep.subr.bf16.mxu0 0
        %998 = vmatpush1.bf16.msra.mxu0 0
        %999 = vmatprep.subr.bf16.mxu0 0
        %1000 = vmatpush1.bf16.msra.mxu0 0
        %1001 = vmatprep.subr.bf16.mxu0 0
        %1002 = vmatpush1.bf16.msra.mxu0 0
        %1003 = vmatprep.subr.bf16.mxu0 0
        %1004 = vmatpush1.bf16.msra.mxu0 %v964
        %1005 = vmatprep.subr.bf16.mxu0 0
        %1006 = vmatpush1.bf16.msra.mxu0 %v963
        %1007 = vmatprep.subr.bf16.mxu0 0
        %1008 = vmatpush2.bf16.msra.mxu0 0
        %1009 = vmatprep.subr.bf16.mxu0 0
        %1010 = vmatpush2.bf16.msra.mxu0 0
        %1011 = vmatprep.subr.bf16.mxu0 0
        %1012 = vmatpush2.bf16.msra.mxu0 0
        %1013 = vmatprep.subr.bf16.mxu0 0
        %1014 = vmatpush2.bf16.msra.mxu0 0
        %1015 = vmatprep.subr.bf16.mxu0 0
        %1016 = vmatpush2.bf16.msra.mxu0 0
        %1017 = vmatprep.subr.bf16.mxu0 0
        %1018 = vmatpush2.bf16.msra.mxu0 0
        %1019 = vmatprep.subr.bf16.mxu0 0
        %1020 = vmatpush2.bf16.msra.mxu0 0
        %1021 = vmatprep.subr.bf16.mxu0 0
        %1022 = vmatpush2.bf16.msra.mxu0 0
        %1023 = vmatprep.mubr.bf16.mxu0 0
        %1024 = vmatmul.mubr.bf16.gmra.mxu0 %v968
        %v1025 = vpop.f32.mrf.mxu0
        %v1026 = vadd.f32 %v853, %v1025
        %v1027 = vpop.f32.mrf.mxu0
        %v1028 = vpop.f32.mrf.mxu0
        %v1029 = vadd.f32 %v856, %v1028
        %v1030 = vpop.f32.mrf.mxu0
        %1031 = vmatprep.mubr.bf16.mxu0 0
        %1032 = vmatmul.mubr.bf16.gmra.mxu0 %v971
        %v1033 = vpop.f32.mrf.mxu0
        %v1034 = vadd.f32 %v861, %v1033
        %v1035 = vpop.f32.mrf.mxu0
        %v1036 = vpop.f32.mrf.mxu0
        %v1037 = vadd.f32 %v864, %v1036
        %v1038 = vpop.f32.mrf.mxu0
        %1039 = vmatprep.mubr.bf16.mxu0 0
        %1040 = vmatmul.mubr.bf16.gmra.mxu0 %v974
        %v1041 = vpop.f32.mrf.mxu0
        %v1042 = vadd.f32 %v869, %v1041
        %v1043 = vpop.f32.mrf.mxu0
        %v1044 = vpop.f32.mrf.mxu0
        %v1045 = vadd.f32 %v872, %v1044
        %v1046 = vpop.f32.mrf.mxu0
        %1047 = vmatprep.mubr.bf16.mxu0 0
        %1048 = vmatmul.mubr.bf16.gmra.mxu0 %v977
        %v1049 = vpop.f32.mrf.mxu0
        %v1050 = vadd.f32 %v877, %v1049
        %v1051 = vpop.f32.mrf.mxu0
        %v1052 = vpop.f32.mrf.mxu0
        %v1053 = vadd.f32 %v880, %v1052
        %v1054 = vpop.f32.mrf.mxu0
        %1055 = vmatprep.mubr.bf16.mxu0 0
        %1056 = vmatmul.mubr.bf16.gmra.mxu0 %v980
        %v1057 = vpop.f32.mrf.mxu0
        %v1058 = vadd.f32 %v885, %v1057
        %v1059 = vpop.f32.mrf.mxu0
        %v1060 = vpop.f32.mrf.mxu0
        %v1061 = vadd.f32 %v888, %v1060
        %v1062 = vpop.f32.mrf.mxu0
        %1063 = vmatprep.mubr.bf16.mxu0 0
        %1064 = vmatmul.mubr.bf16.gmra.mxu0 %v983
        %v1065 = vpop.f32.mrf.mxu0
        %v1066 = vadd.f32 %v893, %v1065
        %v1067 = vpop.f32.mrf.mxu0
        %v1068 = vpop.f32.mrf.mxu0
        %v1069 = vadd.f32 %v896, %v1068
        %v1070 = vpop.f32.mrf.mxu0
        %1071 = vmatprep.mubr.bf16.mxu0 0
        %1072 = vmatmul.mubr.bf16.gmra.mxu0 %v986
        %v1073 = vpop.f32.mrf.mxu0
        %v1074 = vadd.f32 %v901, %v1073
        %v1075 = vpop.f32.mrf.mxu0
        %v1076 = vpop.f32.mrf.mxu0
        %v1077 = vadd.f32 %v904, %v1076
        %v1078 = vpop.f32.mrf.mxu0
        %1079 = vmatprep.mubr.bf16.mxu0 0
        %1080 = vmatmul.mubr.bf16.gmra.mxu0 %v989
        %v1081 = vpop.f32.mrf.mxu0
        %v1082 = vadd.f32 %v909, %v1081
        %v1083 = vpop.f32.mrf.mxu0
        %v1084 = vpop.f32.mrf.mxu0
        %v1085 = vadd.f32 %v912, %v1084
        %v1086 = vpop.f32.mrf.mxu0
        %1087 = vdwg.mxu0
        %v1088 = vld [vmem:[#allocation2] sm:$0xe]
        %v1089 = vld [vmem:[#allocation2 + $0xc] sm:$0xe]
        %v1090 = vld [vmem:[#allocation2 + $0x18] sm:$0xe]
        %v1091 = vld [vmem:[#allocation2 + $0x24] sm:$0xe]
        %v1092 = vld [vmem:[#allocation2 + $0x30] sm:$0xe]
        %v1093 = vld [vmem:[#allocation2 + $0x3c] sm:$0xe]
        %v1094 = vld [vmem:[#allocation2 + $0x48] sm:$0xe]
        %v1095 = vld [vmem:[#allocation2 + $0x54] sm:$0xe]
        %vm1112 = vcmask 1042432
        %vm1113 = vcmask 1046532
        %vm1114 = vmor %vm1112, %vm1113
        %v1115 = vrot.slane %v1088, 5
        %v1116 = vrot.slane %v1115, 4
        %v1117 = vrot.slane %v530, 5
        %v1118 = vsel %vm1114, %v1116, %v1117
        %v1119 = vrot.slane %v1117, 4
        %v1120 = vrot.slane %v549, 5
        %v1121 = vsel %vm1114, %v1119, %v1120
        %v1122 = vrot.slane %v1089, 5
        %v1123 = vrot.slane %v1122, 4
        %v1124 = vrot.slane %v532, 5
        %v1125 = vsel %vm1114, %v1123, %v1124
        %v1126 = vrot.slane %v1124, 4
        %v1127 = vrot.slane %v550, 5
        %v1128 = vsel %vm1114, %v1126, %v1127
        %v1129 = vrot.slane %v1090, 5
        %v1130 = vrot.slane %v1129, 4
        %v1131 = vrot.slane %v534, 5
        %v1132 = vsel %vm1114, %v1130, %v1131
        %v1133 = vrot.slane %v1131, 4
        %v1134 = vrot.slane %v551, 5
        %v1135 = vsel %vm1114, %v1133, %v1134
        %v1136 = vrot.slane %v1091, 5
        %v1137 = vrot.slane %v1136, 4
        %v1138 = vrot.slane %v536, 5
        %v1139 = vsel %vm1114, %v1137, %v1138
        %v1140 = vrot.slane %v1138, 4
        %v1141 = vrot.slane %v552, 5
        %v1142 = vsel %vm1114, %v1140, %v1141
        %v1143 = vrot.slane %v1092, 5
        %v1144 = vrot.slane %v1143, 4
        %v1145 = vrot.slane %v538, 5
        %v1146 = vsel %vm1114, %v1144, %v1145
        %v1147 = vrot.slane %v1145, 4
        %v1148 = vrot.slane %v553, 5
        %v1149 = vsel %vm1114, %v1147, %v1148
        %v1150 = vrot.slane %v1093, 5
        %v1151 = vrot.slane %v1150, 4
        %v1152 = vrot.slane %v540, 5
        %v1153 = vsel %vm1114, %v1151, %v1152
        %v1154 = vrot.slane %v1152, 4
        %v1155 = vrot.slane %v554, 5
        %v1156 = vsel %vm1114, %v1154, %v1155
        %v1157 = vrot.slane %v1094, 5
        %v1158 = vrot.slane %v1157, 4
        %v1159 = vrot.slane %v542, 5
        %v1160 = vsel %vm1114, %v1158, %v1159
        %v1161 = vrot.slane %v1159, 4
        %v1162 = vrot.slane %v555, 5
        %v1163 = vsel %vm1114, %v1161, %v1162
        %v1164 = vrot.slane %v1095, 5
        %v1165 = vrot.slane %v1164, 4
        %v1166 = vrot.slane %v544, 5
        %v1167 = vsel %vm1114, %v1165, %v1166
        %v1168 = vrot.slane %v1166, 4
        %v1169 = vrot.slane %v556, 5
        %v1170 = vsel %vm1114, %v1168, %v1169
        %s1171 = scalar_lea.vmem [#allocation5], 32
        %v1172 = vld [vmem:[%s1171] sm:$0xf]
        %v1173 = vld [vmem:[%s1171 + $0x4] sm:$0xf]
        %v1174 = vld [vmem:[%s1171 + $0x8] sm:$0xf]
        %v1175 = vld [vmem:[%s1171 + $0xc] sm:$0xf]
        %v1176 = vunpack.c.l.b16 %v1118
        %v1177 = vunpack.c.l.b16 %v1121
        %v1178 = vunpack.c.l.b16 %v1125
        %v1179 = vunpack.c.l.b16 %v1128
        %v1180 = vunpack.c.l.b16 %v1132
        %v1181 = vunpack.c.l.b16 %v1135
        %v1182 = vunpack.c.l.b16 %v1139
        %v1183 = vunpack.c.l.b16 %v1142
        %v1184 = vunpack.c.l.b16 %v1146
        %v1185 = vunpack.c.l.b16 %v1149
        %v1186 = vunpack.c.l.b16 %v1153
        %v1187 = vunpack.c.l.b16 %v1156
        %v1188 = vunpack.c.l.b16 %v1160
        %v1189 = vunpack.c.l.b16 %v1163
        %v1190 = vunpack.c.l.b16 %v1167
        %v1191 = vunpack.c.l.b16 %v1170
        %v1192 = vpack.c.b16 %v1177, %v1176
        %v1193 = vpack.c.b16 %v1179, %v1178
        %v1194 = vpack.c.b16 %v1181, %v1180
        %v1195 = vpack.c.b16 %v1183, %v1182
        %v1196 = vpack.c.b16 %v1185, %v1184
        %v1197 = vpack.c.b16 %v1187, %v1186
        %v1198 = vpack.c.b16 %v1189, %v1188
        %v1199 = vpack.c.b16 %v1191, %v1190
        %v1204 = vunpack.c.l.b16 %v1172
        %v1205 = vunpack.c.l.b16 %v1173
        %v1206 = vunpack.c.l.b16 %v1174
        %v1207 = vunpack.c.l.b16 %v1175
        %v1208 = vpack.c.b16 %v1205, %v1204
        %v1209 = vpack.c.b16 %v1207, %v1206
        %v1213 = vsel %vm793, %v1192, 0
        %v1216 = vsel %vm793, %v1193, 0
        %v1219 = vsel %vm793, %v1194, 0
        %v1222 = vsel %vm793, %v1195, 0
        %v1225 = vsel %vm793, %v1196, 0
        %v1228 = vsel %vm793, %v1197, 0
        %v1231 = vsel %vm793, %v1198, 0
        %v1234 = vsel %vm793, %v1199, 0
        %1236 = vmatprep.subr.bf16.mxu0 0
        %1237 = vmatpush1.bf16.msra.mxu0 0
        %1238 = vmatprep.subr.bf16.mxu0 0
        %1239 = vmatpush1.bf16.msra.mxu0 0
        %1240 = vmatprep.subr.bf16.mxu0 0
        %1241 = vmatpush1.bf16.msra.mxu0 0
        %1242 = vmatprep.subr.bf16.mxu0 0
        %1243 = vmatpush1.bf16.msra.mxu0 0
        %1244 = vmatprep.subr.bf16.mxu0 0
        %1245 = vmatpush1.bf16.msra.mxu0 0
        %1246 = vmatprep.subr.bf16.mxu0 0
        %1247 = vmatpush1.bf16.msra.mxu0 0
        %1248 = vmatprep.subr.bf16.mxu0 0
        %1249 = vmatpush1.bf16.msra.mxu0 %v1209
        %1250 = vmatprep.subr.bf16.mxu0 0
        %1251 = vmatpush1.bf16.msra.mxu0 %v1208
        %1252 = vmatprep.subr.bf16.mxu0 0
        %1253 = vmatpush2.bf16.msra.mxu0 0
        %1254 = vmatprep.subr.bf16.mxu0 0
        %1255 = vmatpush2.bf16.msra.mxu0 0
        %1256 = vmatprep.subr.bf16.mxu0 0
        %1257 = vmatpush2.bf16.msra.mxu0 0
        %1258 = vmatprep.subr.bf16.mxu0 0
        %1259 = vmatpush2.bf16.msra.mxu0 0
        %1260 = vmatprep.subr.bf16.mxu0 0
        %1261 = vmatpush2.bf16.msra.mxu0 0
        %1262 = vmatprep.subr.bf16.mxu0 0
        %1263 = vmatpush2.bf16.msra.mxu0 0
        %1264 = vmatprep.subr.bf16.mxu0 0
        %1265 = vmatpush2.bf16.msra.mxu0 0
        %1266 = vmatprep.subr.bf16.mxu0 0
        %1267 = vmatpush2.bf16.msra.mxu0 0
        %1268 = vmatprep.mubr.bf16.mxu0 0
        %1269 = vmatmul.mubr.bf16.gmra.mxu0 %v1213
        %v1270 = vpop.f32.mrf.mxu0
        %v1271 = vadd.f32 0.0, %v1270
        %v1272 = vpop.f32.mrf.mxu0
        %v1273 = vpop.f32.mrf.mxu0
        %v1274 = vadd.f32 0.0, %v1273
        %v1275 = vpop.f32.mrf.mxu0
        %1276 = vmatprep.mubr.bf16.mxu0 0
        %1277 = vmatmul.mubr.bf16.gmra.mxu0 %v1216
        %v1278 = vpop.f32.mrf.mxu0
        %v1279 = vadd.f32 0.0, %v1278
        %v1280 = vpop.f32.mrf.mxu0
        %v1281 = vpop.f32.mrf.mxu0
        %v1282 = vadd.f32 0.0, %v1281
        %v1283 = vpop.f32.mrf.mxu0
        %1284 = vmatprep.mubr.bf16.mxu0 0
        %1285 = vmatmul.mubr.bf16.gmra.mxu0 %v1219
        %v1286 = vpop.f32.mrf.mxu0
        %v1287 = vadd.f32 0.0, %v1286
        %v1288 = vpop.f32.mrf.mxu0
        %v1289 = vpop.f32.mrf.mxu0
        %v1290 = vadd.f32 0.0, %v1289
        %v1291 = vpop.f32.mrf.mxu0
        %1292 = vmatprep.mubr.bf16.mxu0 0
        %1293 = vmatmul.mubr.bf16.gmra.mxu0 %v1222
        %v1294 = vpop.f32.mrf.mxu0
        %v1295 = vadd.f32 0.0, %v1294
        %v1296 = vpop.f32.mrf.mxu0
        %v1297 = vpop.f32.mrf.mxu0
        %v1298 = vadd.f32 0.0, %v1297
        %v1299 = vpop.f32.mrf.mxu0
        %1300 = vmatprep.mubr.bf16.mxu0 0
        %1301 = vmatmul.mubr.bf16.gmra.mxu0 %v1225
        %v1302 = vpop.f32.mrf.mxu0
        %v1303 = vadd.f32 0.0, %v1302
        %v1304 = vpop.f32.mrf.mxu0
        %v1305 = vpop.f32.mrf.mxu0
        %v1306 = vadd.f32 0.0, %v1305
        %v1307 = vpop.f32.mrf.mxu0
        %1308 = vmatprep.mubr.bf16.mxu0 0
        %1309 = vmatmul.mubr.bf16.gmra.mxu0 %v1228
        %v1310 = vpop.f32.mrf.mxu0
        %v1311 = vadd.f32 0.0, %v1310
        %v1312 = vpop.f32.mrf.mxu0
        %v1313 = vpop.f32.mrf.mxu0
        %v1314 = vadd.f32 0.0, %v1313
        %v1315 = vpop.f32.mrf.mxu0
        %1316 = vmatprep.mubr.bf16.mxu0 0
        %1317 = vmatmul.mubr.bf16.gmra.mxu0 %v1231
        %v1318 = vpop.f32.mrf.mxu0
        %v1319 = vadd.f32 0.0, %v1318
        %v1320 = vpop.f32.mrf.mxu0
        %v1321 = vpop.f32.mrf.mxu0
        %v1322 = vadd.f32 0.0, %v1321
        %v1323 = vpop.f32.mrf.mxu0
        %1324 = vmatprep.mubr.bf16.mxu0 0
        %1325 = vmatmul.mubr.bf16.gmra.mxu0 %v1234
        %v1326 = vpop.f32.mrf.mxu0
        %v1327 = vadd.f32 0.0, %v1326
        %v1328 = vpop.f32.mrf.mxu0
        %v1329 = vpop.f32.mrf.mxu0
        %v1330 = vadd.f32 0.0, %v1329
        %v1331 = vpop.f32.mrf.mxu0
        %1332 = vdwg.mxu0
        %v1333 = vadd.f32 %v1026, %v1271
        %v1334 = vadd.f32 %v1029, %v1274
        %v1335 = vadd.f32 %v1034, %v1279
        %v1336 = vadd.f32 %v1037, %v1282
        %v1337 = vadd.f32 %v1042, %v1287
        %v1338 = vadd.f32 %v1045, %v1290
        %v1339 = vadd.f32 %v1050, %v1295
        %v1340 = vadd.f32 %v1053, %v1298
        %v1341 = vadd.f32 %v1058, %v1303
        %v1342 = vadd.f32 %v1061, %v1306
        %v1343 = vadd.f32 %v1066, %v1311
        %v1344 = vadd.f32 %v1069, %v1314
        %v1345 = vadd.f32 %v1074, %v1319
        %v1346 = vadd.f32 %v1077, %v1322
        %v1347 = vadd.f32 %v1082, %v1327
        %v1348 = vadd.f32 %v1085, %v1330
        %v1349 = vld [vmem:[#allocation2 + $0x8] sm:$0x3]
        %v1350 = vld [vmem:[#allocation2 + $0x14] sm:$0x3]
        %v1351 = vld [vmem:[#allocation2 + $0x20] sm:$0x3]
        %v1352 = vld [vmem:[#allocation2 + $0x2c] sm:$0x3]
        %v1353 = vld [vmem:[#allocation2 + $0x38] sm:$0x3]
        %v1354 = vld [vmem:[#allocation2 + $0x44] sm:$0x3]
        %v1355 = vld [vmem:[#allocation2 + $0x50] sm:$0x3]
        %v1356 = vld [vmem:[#allocation2 + $0x5c] sm:$0x3]
        %vm1357 = vsmask.f32 2304
        %vm1358 = vsmask.f32 6416
        %vm1359 = vmor %vm1357, %vm1358
        %v1361 = vshrl.u32 %v1088, 16
        %v1363 = vrot.slane %v1361, 5
        %v1364 = vshll.u32 %v1088, 16
        %v1366 = vrot.slane %v1364, 6
        %v1367 = vor.u32 %v1363, %v1366
        %v1368 = vrot.slane %v1367, 4
        %v1369 = vrot.slane %v574, 5
        %v1370 = vrot.slane %v570, 6
        %v1371 = vor.u32 %v1369, %v1370
        %v1372 = vsel %vm1359, %v1368, %v1371
        %v1373 = vrot.slane %v1371, 4
        %v1375 = vshrl.u32 %v1349, 16
        %v1377 = vrot.slane %v1375, 5
        %v1378 = vshll.u32 %v1349, 16
        %v1380 = vrot.slane %v1378, 6
        %v1381 = vor.u32 %v1377, %v1380
        %v1382 = vsel %vm1359, %v1373, %v1381
        %v1384 = vshrl.u32 %v1089, 16
        %v1386 = vrot.slane %v1384, 5
        %v1387 = vshll.u32 %v1089, 16
        %v1389 = vrot.slane %v1387, 6
        %v1390 = vor.u32 %v1386, %v1389
        %v1391 = vrot.slane %v1390, 4
        %v1392 = vrot.slane %v598, 5
        %v1393 = vrot.slane %v594, 6
        %v1394 = vor.u32 %v1392, %v1393
        %v1395 = vsel %vm1359, %v1391, %v1394
        %v1396 = vrot.slane %v1394, 4
        %v1398 = vshrl.u32 %v1350, 16
        %v1400 = vrot.slane %v1398, 5
        %v1401 = vshll.u32 %v1350, 16
        %v1403 = vrot.slane %v1401, 6
        %v1404 = vor.u32 %v1400, %v1403
        %v1405 = vsel %vm1359, %v1396, %v1404
        %v1407 = vshrl.u32 %v1090, 16
        %v1409 = vrot.slane %v1407, 5
        %v1410 = vshll.u32 %v1090, 16
        %v1412 = vrot.slane %v1410, 6
        %v1413 = vor.u32 %v1409, %v1412
        %v1414 = vrot.slane %v1413, 4
        %v1415 = vrot.slane %v622, 5
        %v1416 = vrot.slane %v618, 6
        %v1417 = vor.u32 %v1415, %v1416
        %v1418 = vsel %vm1359, %v1414, %v1417
        %v1419 = vrot.slane %v1417, 4
        %v1421 = vshrl.u32 %v1351, 16
        %v1423 = vrot.slane %v1421, 5
        %v1424 = vshll.u32 %v1351, 16
        %v1426 = vrot.slane %v1424, 6
        %v1427 = vor.u32 %v1423, %v1426
        %v1428 = vsel %vm1359, %v1419, %v1427
        %v1430 = vshrl.u32 %v1091, 16
        %v1432 = vrot.slane %v1430, 5
        %v1433 = vshll.u32 %v1091, 16
        %v1435 = vrot.slane %v1433, 6
        %v1436 = vor.u32 %v1432, %v1435
        %v1437 = vrot.slane %v1436, 4
        %v1438 = vrot.slane %v646, 5
        %v1439 = vrot.slane %v642, 6
        %v1440 = vor.u32 %v1438, %v1439
        %v1441 = vsel %vm1359, %v1437, %v1440
        %v1442 = vrot.slane %v1440, 4
        %v1444 = vshrl.u32 %v1352, 16
        %v1446 = vrot.slane %v1444, 5
        %v1447 = vshll.u32 %v1352, 16
        %v1449 = vrot.slane %v1447, 6
        %v1450 = vor.u32 %v1446, %v1449
        %v1451 = vsel %vm1359, %v1442, %v1450
        %v1453 = vshrl.u32 %v1092, 16
        %v1455 = vrot.slane %v1453, 5
        %v1456 = vshll.u32 %v1092, 16
        %v1458 = vrot.slane %v1456, 6
        %v1459 = vor.u32 %v1455, %v1458
        %v1460 = vrot.slane %v1459, 4
        %v1461 = vrot.slane %v670, 5
        %v1462 = vrot.slane %v666, 6
        %v1463 = vor.u32 %v1461, %v1462
        %v1464 = vsel %vm1359, %v1460, %v1463
        %v1465 = vrot.slane %v1463, 4
        %v1467 = vshrl.u32 %v1353, 16
        %v1469 = vrot.slane %v1467, 5
        %v1470 = vshll.u32 %v1353, 16
        %v1472 = vrot.slane %v1470, 6
        %v1473 = vor.u32 %v1469, %v1472
        %v1474 = vsel %vm1359, %v1465, %v1473
        %v1476 = vshrl.u32 %v1093, 16
        %v1478 = vrot.slane %v1476, 5
        %v1479 = vshll.u32 %v1093, 16
        %v1481 = vrot.slane %v1479, 6
        %v1482 = vor.u32 %v1478, %v1481
        %v1483 = vrot.slane %v1482, 4
        %v1484 = vrot.slane %v694, 5
        %v1485 = vrot.slane %v690, 6
        %v1486 = vor.u32 %v1484, %v1485
        %v1487 = vsel %vm1359, %v1483, %v1486
        %v1488 = vrot.slane %v1486, 4
        %v1490 = vshrl.u32 %v1354, 16
        %v1492 = vrot.slane %v1490, 5
        %v1493 = vshll.u32 %v1354, 16
        %v1495 = vrot.slane %v1493, 6
        %v1496 = vor.u32 %v1492, %v1495
        %v1497 = vsel %vm1359, %v1488, %v1496
        %v1499 = vshrl.u32 %v1094, 16
        %v1501 = vrot.slane %v1499, 5
        %v1502 = vshll.u32 %v1094, 16
        %v1504 = vrot.slane %v1502, 6
        %v1505 = vor.u32 %v1501, %v1504
        %v1506 = vrot.slane %v1505, 4
        %v1507 = vrot.slane %v718, 5
        %v1508 = vrot.slane %v714, 6
        %v1509 = vor.u32 %v1507, %v1508
        %v1510 = vsel %vm1359, %v1506, %v1509
        %v1511 = vrot.slane %v1509, 4
        %v1513 = vshrl.u32 %v1355, 16
        %v1515 = vrot.slane %v1513, 5
        %v1516 = vshll.u32 %v1355, 16
        %v1518 = vrot.slane %v1516, 6
        %v1519 = vor.u32 %v1515, %v1518
        %v1520 = vsel %vm1359, %v1511, %v1519
        %v1522 = vshrl.u32 %v1095, 16
        %v1524 = vrot.slane %v1522, 5
        %v1525 = vshll.u32 %v1095, 16
        %v1527 = vrot.slane %v1525, 6
        %v1528 = vor.u32 %v1524, %v1527
        %v1529 = vrot.slane %v1528, 4
        %v1530 = vrot.slane %v742, 5
        %v1531 = vrot.slane %v738, 6
        %v1532 = vor.u32 %v1530, %v1531
        %v1533 = vsel %vm1359, %v1529, %v1532
        %v1534 = vrot.slane %v1532, 4
        %v1536 = vshrl.u32 %v1356, 16
        %v1538 = vrot.slane %v1536, 5
        %v1539 = vshll.u32 %v1356, 16
        %v1541 = vrot.slane %v1539, 6
        %v1542 = vor.u32 %v1538, %v1541
        %v1543 = vsel %vm1359, %v1534, %v1542
        %s1544 = scalar_lea.vmem [#allocation5], 48
        %v1545 = vld [vmem:[%s1544] sm:$0xf]
        %v1546 = vld [vmem:[%s1544 + $0x4] sm:$0xf]
        %v1547 = vld [vmem:[%s1544 + $0x8] sm:$0xf]
        %v1548 = vld [vmem:[%s1544 + $0xc] sm:$0xf]
        %v1549 = vunpack.c.l.b16 %v1372
        %v1550 = vunpack.c.l.b16 %v1382
        %v1551 = vunpack.c.l.b16 %v1395
        %v1552 = vunpack.c.l.b16 %v1405
        %v1553 = vunpack.c.l.b16 %v1418
        %v1554 = vunpack.c.l.b16 %v1428
        %v1555 = vunpack.c.l.b16 %v1441
        %v1556 = vunpack.c.l.b16 %v1451
        %v1557 = vunpack.c.l.b16 %v1464
        %v1558 = vunpack.c.l.b16 %v1474
        %v1559 = vunpack.c.l.b16 %v1487
        %v1560 = vunpack.c.l.b16 %v1497
        %v1561 = vunpack.c.l.b16 %v1510
        %v1562 = vunpack.c.l.b16 %v1520
        %v1563 = vunpack.c.l.b16 %v1533
        %v1564 = vunpack.c.l.b16 %v1543
        %v1565 = vpack.c.b16 %v1550, %v1549
        %v1566 = vpack.c.b16 %v1552, %v1551
        %v1567 = vpack.c.b16 %v1554, %v1553
        %v1568 = vpack.c.b16 %v1556, %v1555
        %v1569 = vpack.c.b16 %v1558, %v1557
        %v1570 = vpack.c.b16 %v1560, %v1559
        %v1571 = vpack.c.b16 %v1562, %v1561
        %v1572 = vpack.c.b16 %v1564, %v1563
        %v1577 = vunpack.c.l.b16 %v1545
        %v1578 = vunpack.c.l.b16 %v1546
        %v1579 = vunpack.c.l.b16 %v1547
        %v1580 = vunpack.c.l.b16 %v1548
        %v1581 = vpack.c.b16 %v1578, %v1577
        %v1582 = vpack.c.b16 %v1580, %v1579
        %v1586 = vsel %vm793, %v1565, 0
        %v1589 = vsel %vm793, %v1566, 0
        %v1592 = vsel %vm793, %v1567, 0
        %v1595 = vsel %vm793, %v1568, 0
        %v1598 = vsel %vm793, %v1569, 0
        %v1601 = vsel %vm793, %v1570, 0
        %v1604 = vsel %vm793, %v1571, 0
        %v1607 = vsel %vm793, %v1572, 0
        %1609 = vmatprep.subr.bf16.mxu0 0
        %1610 = vmatpush1.bf16.msra.mxu0 0
        %1611 = vmatprep.subr.bf16.mxu0 0
        %1612 = vmatpush1.bf16.msra.mxu0 0
        %1613 = vmatprep.subr.bf16.mxu0 0
        %1614 = vmatpush1.bf16.msra.mxu0 0
        %1615 = vmatprep.subr.bf16.mxu0 0
        %1616 = vmatpush1.bf16.msra.mxu0 0
        %1617 = vmatprep.subr.bf16.mxu0 0
        %1618 = vmatpush1.bf16.msra.mxu0 0
        %1619 = vmatprep.subr.bf16.mxu0 0
        %1620 = vmatpush1.bf16.msra.mxu0 0
        %1621 = vmatprep.subr.bf16.mxu0 0
        %1622 = vmatpush1.bf16.msra.mxu0 %v1582
        %1623 = vmatprep.subr.bf16.mxu0 0
        %1624 = vmatpush1.bf16.msra.mxu0 %v1581
        %1625 = vmatprep.subr.bf16.mxu0 0
        %1626 = vmatpush2.bf16.msra.mxu0 0
        %1627 = vmatprep.subr.bf16.mxu0 0
        %1628 = vmatpush2.bf16.msra.mxu0 0
        %1629 = vmatprep.subr.bf16.mxu0 0
        %1630 = vmatpush2.bf16.msra.mxu0 0
        %1631 = vmatprep.subr.bf16.mxu0 0
        %1632 = vmatpush2.bf16.msra.mxu0 0
        %1633 = vmatprep.subr.bf16.mxu0 0
        %1634 = vmatpush2.bf16.msra.mxu0 0
        %1635 = vmatprep.subr.bf16.mxu0 0
        %1636 = vmatpush2.bf16.msra.mxu0 0
        %1637 = vmatprep.subr.bf16.mxu0 0
        %1638 = vmatpush2.bf16.msra.mxu0 0
        %1639 = vmatprep.subr.bf16.mxu0 0
        %1640 = vmatpush2.bf16.msra.mxu0 0
        %1641 = vmatprep.mubr.bf16.mxu0 0
        %1642 = vmatmul.mubr.bf16.gmra.mxu0 %v1586
        %v1643 = vpop.f32.mrf.mxu0
        %v1644 = vadd.f32 0.0, %v1643
        %v1645 = vpop.f32.mrf.mxu0
        %v1646 = vpop.f32.mrf.mxu0
        %v1647 = vadd.f32 0.0, %v1646
        %v1648 = vpop.f32.mrf.mxu0
        %1649 = vmatprep.mubr.bf16.mxu0 0
        %1650 = vmatmul.mubr.bf16.gmra.mxu0 %v1589
        %v1651 = vpop.f32.mrf.mxu0
        %v1652 = vadd.f32 0.0, %v1651
        %v1653 = vpop.f32.mrf.mxu0
        %v1654 = vpop.f32.mrf.mxu0
        %v1655 = vadd.f32 0.0, %v1654
        %v1656 = vpop.f32.mrf.mxu0
        %1657 = vmatprep.mubr.bf16.mxu0 0
        %1658 = vmatmul.mubr.bf16.gmra.mxu0 %v1592
        %v1659 = vpop.f32.mrf.mxu0
        %v1660 = vadd.f32 0.0, %v1659
        %v1661 = vpop.f32.mrf.mxu0
        %v1662 = vpop.f32.mrf.mxu0
        %v1663 = vadd.f32 0.0, %v1662
        %v1664 = vpop.f32.mrf.mxu0
        %1665 = vmatprep.mubr.bf16.mxu0 0
        %1666 = vmatmul.mubr.bf16.gmra.mxu0 %v1595
        %v1667 = vpop.f32.mrf.mxu0
        %v1668 = vadd.f32 0.0, %v1667
        %v1669 = vpop.f32.mrf.mxu0
        %v1670 = vpop.f32.mrf.mxu0
        %v1671 = vadd.f32 0.0, %v1670
        %v1672 = vpop.f32.mrf.mxu0
        %1673 = vmatprep.mubr.bf16.mxu0 0
        %1674 = vmatmul.mubr.bf16.gmra.mxu0 %v1598
        %v1675 = vpop.f32.mrf.mxu0
        %v1676 = vadd.f32 0.0, %v1675
        %v1677 = vpop.f32.mrf.mxu0
        %v1678 = vpop.f32.mrf.mxu0
        %v1679 = vadd.f32 0.0, %v1678
        %v1680 = vpop.f32.mrf.mxu0
        %1681 = vmatprep.mubr.bf16.mxu0 0
        %1682 = vmatmul.mubr.bf16.gmra.mxu0 %v1601
        %v1683 = vpop.f32.mrf.mxu0
        %v1684 = vadd.f32 0.0, %v1683
        %v1685 = vpop.f32.mrf.mxu0
        %v1686 = vpop.f32.mrf.mxu0
        %v1687 = vadd.f32 0.0, %v1686
        %v1688 = vpop.f32.mrf.mxu0
        %1689 = vmatprep.mubr.bf16.mxu0 0
        %1690 = vmatmul.mubr.bf16.gmra.mxu0 %v1604
        %v1691 = vpop.f32.mrf.mxu0
        %v1692 = vadd.f32 0.0, %v1691
        %v1693 = vpop.f32.mrf.mxu0
        %v1694 = vpop.f32.mrf.mxu0
        %v1695 = vadd.f32 0.0, %v1694
        %v1696 = vpop.f32.mrf.mxu0
        %1697 = vmatprep.mubr.bf16.mxu0 0
        %1698 = vmatmul.mubr.bf16.gmra.mxu0 %v1607
        %v1699 = vpop.f32.mrf.mxu0
        %v1700 = vadd.f32 0.0, %v1699
        %v1701 = vpop.f32.mrf.mxu0
        %v1702 = vpop.f32.mrf.mxu0
        %v1703 = vadd.f32 0.0, %v1702
        %v1704 = vpop.f32.mrf.mxu0
        %1705 = vdwg.mxu0
        %v1706 = vadd.f32 %v1333, %v1644
        %v1707 = vadd.f32 %v1334, %v1647
        %v1708 = vadd.f32 %v1335, %v1652
        %v1709 = vadd.f32 %v1336, %v1655
        %v1710 = vadd.f32 %v1337, %v1660
        %v1711 = vadd.f32 %v1338, %v1663
        %v1712 = vadd.f32 %v1339, %v1668
        %v1713 = vadd.f32 %v1340, %v1671
        %v1714 = vadd.f32 %v1341, %v1676
        %v1715 = vadd.f32 %v1342, %v1679
        %v1716 = vadd.f32 %v1343, %v1684
        %v1717 = vadd.f32 %v1344, %v1687
        %v1718 = vadd.f32 %v1345, %v1692
        %v1719 = vadd.f32 %v1346, %v1695
        %v1720 = vadd.f32 %v1347, %v1700
        %v1721 = vadd.f32 %v1348, %v1703
        %v1722 = vld [vmem:[#allocation2] sm:$0xc]
        %v1723 = vld [vmem:[#allocation2 + $0xc] sm:$0xc]
        %v1724 = vld [vmem:[#allocation2 + $0x18] sm:$0xc]
        %v1725 = vld [vmem:[#allocation2 + $0x24] sm:$0xc]
        %v1726 = vld [vmem:[#allocation2 + $0x30] sm:$0xc]
        %v1727 = vld [vmem:[#allocation2 + $0x3c] sm:$0xc]
        %v1728 = vld [vmem:[#allocation2 + $0x48] sm:$0xc]
        %v1729 = vld [vmem:[#allocation2 + $0x54] sm:$0xc]
        %v1746 = vrot.slane %v1722, 6
        %v1747 = vrot.slane %v1746, 4
        %v1748 = vrot.slane %v530, 6
        %v1749 = vsel %vm437, %v1747, %v1748
        %v1750 = vrot.slane %v1748, 4
        %v1751 = vrot.slane %v1349, 6
        %v1752 = vsel %vm437, %v1750, %v1751
        %v1753 = vrot.slane %v1723, 6
        %v1754 = vrot.slane %v1753, 4
        %v1755 = vrot.slane %v532, 6
        %v1756 = vsel %vm437, %v1754, %v1755
        %v1757 = vrot.slane %v1755, 4
        %v1758 = vrot.slane %v1350, 6
        %v1759 = vsel %vm437, %v1757, %v1758
        %v1760 = vrot.slane %v1724, 6
        %v1761 = vrot.slane %v1760, 4
        %v1762 = vrot.slane %v534, 6
        %v1763 = vsel %vm437, %v1761, %v1762
        %v1764 = vrot.slane %v1762, 4
        %v1765 = vrot.slane %v1351, 6
        %v1766 = vsel %vm437, %v1764, %v1765
        %v1767 = vrot.slane %v1725, 6
        %v1768 = vrot.slane %v1767, 4
        %v1769 = vrot.slane %v536, 6
        %v1770 = vsel %vm437, %v1768, %v1769
        %v1771 = vrot.slane %v1769, 4
        %v1772 = vrot.slane %v1352, 6
        %v1773 = vsel %vm437, %v1771, %v1772
        %v1774 = vrot.slane %v1726, 6
        %v1775 = vrot.slane %v1774, 4
        %v1776 = vrot.slane %v538, 6
        %v1777 = vsel %vm437, %v1775, %v1776
        %v1778 = vrot.slane %v1776, 4
        %v1779 = vrot.slane %v1353, 6
        %v1780 = vsel %vm437, %v1778, %v1779
        %v1781 = vrot.slane %v1727, 6
        %v1782 = vrot.slane %v1781, 4
        %v1783 = vrot.slane %v540, 6
        %v1784 = vsel %vm437, %v1782, %v1783
        %v1785 = vrot.slane %v1783, 4
        %v1786 = vrot.slane %v1354, 6
        %v1787 = vsel %vm437, %v1785, %v1786
        %v1788 = vrot.slane %v1728, 6
        %v1789 = vrot.slane %v1788, 4
        %v1790 = vrot.slane %v542, 6
        %v1791 = vsel %vm437, %v1789, %v1790
        %v1792 = vrot.slane %v1790, 4
        %v1793 = vrot.slane %v1355, 6
        %v1794 = vsel %vm437, %v1792, %v1793
        %v1795 = vrot.slane %v1729, 6
        %v1796 = vrot.slane %v1795, 4
        %v1797 = vrot.slane %v544, 6
        %v1798 = vsel %vm437, %v1796, %v1797
        %v1799 = vrot.slane %v1797, 4
        %v1800 = vrot.slane %v1356, 6
        %v1801 = vsel %vm437, %v1799, %v1800
        %s1802 = scalar_lea.vmem [#allocation5], 64
        %v1803 = vld [vmem:[%s1802] sm:$0xf]
        %v1804 = vld [vmem:[%s1802 + $0x4] sm:$0xf]
        %v1805 = vld [vmem:[%s1802 + $0x8] sm:$0xf]
        %v1806 = vld [vmem:[%s1802 + $0xc] sm:$0xf]
        %v1807 = vunpack.c.l.b16 %v1749
        %v1808 = vunpack.c.l.b16 %v1752
        %v1809 = vunpack.c.l.b16 %v1756
        %v1810 = vunpack.c.l.b16 %v1759
        %v1811 = vunpack.c.l.b16 %v1763
        %v1812 = vunpack.c.l.b16 %v1766
        %v1813 = vunpack.c.l.b16 %v1770
        %v1814 = vunpack.c.l.b16 %v1773
        %v1815 = vunpack.c.l.b16 %v1777
        %v1816 = vunpack.c.l.b16 %v1780
        %v1817 = vunpack.c.l.b16 %v1784
        %v1818 = vunpack.c.l.b16 %v1787
        %v1819 = vunpack.c.l.b16 %v1791
        %v1820 = vunpack.c.l.b16 %v1794
        %v1821 = vunpack.c.l.b16 %v1798
        %v1822 = vunpack.c.l.b16 %v1801
        %v1823 = vpack.c.b16 %v1808, %v1807
        %v1824 = vpack.c.b16 %v1810, %v1809
        %v1825 = vpack.c.b16 %v1812, %v1811
        %v1826 = vpack.c.b16 %v1814, %v1813
        %v1827 = vpack.c.b16 %v1816, %v1815
        %v1828 = vpack.c.b16 %v1818, %v1817
        %v1829 = vpack.c.b16 %v1820, %v1819
        %v1830 = vpack.c.b16 %v1822, %v1821
        %v1835 = vunpack.c.l.b16 %v1803
        %v1836 = vunpack.c.l.b16 %v1804
        %v1837 = vunpack.c.l.b16 %v1805
        %v1838 = vunpack.c.l.b16 %v1806
        %v1839 = vpack.c.b16 %v1836, %v1835
        %v1840 = vpack.c.b16 %v1838, %v1837
        %v1844 = vsel %vm793, %v1823, 0
        %v1847 = vsel %vm793, %v1824, 0
        %v1850 = vsel %vm793, %v1825, 0
        %v1853 = vsel %vm793, %v1826, 0
        %v1856 = vsel %vm793, %v1827, 0
        %v1859 = vsel %vm793, %v1828, 0
        %v1862 = vsel %vm793, %v1829, 0
        %v1865 = vsel %vm793, %v1830, 0
        %1867 = vmatprep.subr.bf16.mxu0 0
        %1868 = vmatpush1.bf16.msra.mxu0 0
        %1869 = vmatprep.subr.bf16.mxu0 0
        %1870 = vmatpush1.bf16.msra.mxu0 0
        %1871 = vmatprep.subr.bf16.mxu0 0
        %1872 = vmatpush1.bf16.msra.mxu0 0
        %1873 = vmatprep.subr.bf16.mxu0 0
        %1874 = vmatpush1.bf16.msra.mxu0 0
        %1875 = vmatprep.subr.bf16.mxu0 0
        %1876 = vmatpush1.bf16.msra.mxu0 0
        %1877 = vmatprep.subr.bf16.mxu0 0
        %1878 = vmatpush1.bf16.msra.mxu0 0
        %1879 = vmatprep.subr.bf16.mxu0 0
        %1880 = vmatpush1.bf16.msra.mxu0 %v1840
        %1881 = vmatprep.subr.bf16.mxu0 0
        %1882 = vmatpush1.bf16.msra.mxu0 %v1839
        %1883 = vmatprep.subr.bf16.mxu0 0
        %1884 = vmatpush2.bf16.msra.mxu0 0
        %1885 = vmatprep.subr.bf16.mxu0 0
        %1886 = vmatpush2.bf16.msra.mxu0 0
        %1887 = vmatprep.subr.bf16.mxu0 0
        %1888 = vmatpush2.bf16.msra.mxu0 0
        %1889 = vmatprep.subr.bf16.mxu0 0
        %1890 = vmatpush2.bf16.msra.mxu0 0
        %1891 = vmatprep.subr.bf16.mxu0 0
        %1892 = vmatpush2.bf16.msra.mxu0 0
        %1893 = vmatprep.subr.bf16.mxu0 0
        %1894 = vmatpush2.bf16.msra.mxu0 0
        %1895 = vmatprep.subr.bf16.mxu0 0
        %1896 = vmatpush2.bf16.msra.mxu0 0
        %1897 = vmatprep.subr.bf16.mxu0 0
        %1898 = vmatpush2.bf16.msra.mxu0 0
        %1899 = vmatprep.mubr.bf16.mxu0 0
        %1900 = vmatmul.mubr.bf16.gmra.mxu0 %v1844
        %v1901 = vpop.f32.mrf.mxu0
        %v1902 = vadd.f32 0.0, %v1901
        %v1903 = vpop.f32.mrf.mxu0
        %v1904 = vpop.f32.mrf.mxu0
        %v1905 = vadd.f32 0.0, %v1904
        %v1906 = vpop.f32.mrf.mxu0
        %1907 = vmatprep.mubr.bf16.mxu0 0
        %1908 = vmatmul.mubr.bf16.gmra.mxu0 %v1847
        %v1909 = vpop.f32.mrf.mxu0
        %v1910 = vadd.f32 0.0, %v1909
        %v1911 = vpop.f32.mrf.mxu0
        %v1912 = vpop.f32.mrf.mxu0
        %v1913 = vadd.f32 0.0, %v1912
        %v1914 = vpop.f32.mrf.mxu0
        %1915 = vmatprep.mubr.bf16.mxu0 0
        %1916 = vmatmul.mubr.bf16.gmra.mxu0 %v1850
        %v1917 = vpop.f32.mrf.mxu0
        %v1918 = vadd.f32 0.0, %v1917
        %v1919 = vpop.f32.mrf.mxu0
        %v1920 = vpop.f32.mrf.mxu0
        %v1921 = vadd.f32 0.0, %v1920
        %v1922 = vpop.f32.mrf.mxu0
        %1923 = vmatprep.mubr.bf16.mxu0 0
        %1924 = vmatmul.mubr.bf16.gmra.mxu0 %v1853
        %v1925 = vpop.f32.mrf.mxu0
        %v1926 = vadd.f32 0.0, %v1925
        %v1927 = vpop.f32.mrf.mxu0
        %v1928 = vpop.f32.mrf.mxu0
        %v1929 = vadd.f32 0.0, %v1928
        %v1930 = vpop.f32.mrf.mxu0
        %1931 = vmatprep.mubr.bf16.mxu0 0
        %1932 = vmatmul.mubr.bf16.gmra.mxu0 %v1856
        %v1933 = vpop.f32.mrf.mxu0
        %v1934 = vadd.f32 0.0, %v1933
        %v1935 = vpop.f32.mrf.mxu0
        %v1936 = vpop.f32.mrf.mxu0
        %v1937 = vadd.f32 0.0, %v1936
        %v1938 = vpop.f32.mrf.mxu0
        %1939 = vmatprep.mubr.bf16.mxu0 0
        %1940 = vmatmul.mubr.bf16.gmra.mxu0 %v1859
        %v1941 = vpop.f32.mrf.mxu0
        %v1942 = vadd.f32 0.0, %v1941
        %v1943 = vpop.f32.mrf.mxu0
        %v1944 = vpop.f32.mrf.mxu0
        %v1945 = vadd.f32 0.0, %v1944
        %v1946 = vpop.f32.mrf.mxu0
        %1947 = vmatprep.mubr.bf16.mxu0 0
        %1948 = vmatmul.mubr.bf16.gmra.mxu0 %v1862
        %v1949 = vpop.f32.mrf.mxu0
        %v1950 = vadd.f32 0.0, %v1949
        %v1951 = vpop.f32.mrf.mxu0
        %v1952 = vpop.f32.mrf.mxu0
        %v1953 = vadd.f32 0.0, %v1952
        %v1954 = vpop.f32.mrf.mxu0
        %1955 = vmatprep.mubr.bf16.mxu0 0
        %1956 = vmatmul.mubr.bf16.gmra.mxu0 %v1865
        %v1957 = vpop.f32.mrf.mxu0
        %v1958 = vadd.f32 0.0, %v1957
        %v1959 = vpop.f32.mrf.mxu0
        %v1960 = vpop.f32.mrf.mxu0
        %v1961 = vadd.f32 0.0, %v1960
        %v1962 = vpop.f32.mrf.mxu0
        %1963 = vdwg.mxu0
        %v1964 = vadd.f32 %v1706, %v1902
        %v1965 = vadd.f32 %v1707, %v1905
        %v1966 = vadd.f32 %v1708, %v1910
        %v1967 = vadd.f32 %v1709, %v1913
        %v1968 = vadd.f32 %v1710, %v1918
        %v1969 = vadd.f32 %v1711, %v1921
        %v1970 = vadd.f32 %v1712, %v1926
        %v1971 = vadd.f32 %v1713, %v1929
        %v1972 = vadd.f32 %v1714, %v1934
        %v1973 = vadd.f32 %v1715, %v1937
        %v1974 = vadd.f32 %v1716, %v1942
        %v1975 = vadd.f32 %v1717, %v1945
        %v1976 = vadd.f32 %v1718, %v1950
        %v1977 = vadd.f32 %v1719, %v1953
        %v1978 = vadd.f32 %v1720, %v1958
        %v1979 = vadd.f32 %v1721, %v1961
        %v1980 = vld [vmem:[%s352 + $0x4] sm:$0xc]
        %v1981 = vld [vmem:[%s352 + $0xc] sm:$0xc]
        %v1982 = vld [vmem:[%s352 + $0x14] sm:$0xc]
        %v1983 = vld [vmem:[%s352 + $0x1c] sm:$0xc]
        %v1984 = vld [vmem:[%s352 + $0x24] sm:$0xc]
        %v1985 = vld [vmem:[%s352 + $0x2c] sm:$0xc]
        %v1986 = vld [vmem:[%s352 + $0x34] sm:$0xc]
        %v1987 = vld [vmem:[%s352 + $0x3c] sm:$0xc]
        %v1996 = vrot.slane %v1980, 6
        %v1997 = vrot.slane %v1996, 4
        %v1998 = vrot.slane %v1981, 6
        %v1999 = vrot.slane %v1998, 4
        %v2000 = vrot.slane %v1982, 6
        %v2001 = vrot.slane %v2000, 4
        %v2002 = vrot.slane %v1983, 6
        %v2003 = vrot.slane %v2002, 4
        %v2004 = vrot.slane %v1984, 6
        %v2005 = vrot.slane %v2004, 4
        %v2006 = vrot.slane %v1985, 6
        %v2007 = vrot.slane %v2006, 4
        %v2008 = vrot.slane %v1986, 6
        %v2009 = vrot.slane %v2008, 4
        %v2010 = vrot.slane %v1987, 6
        %v2011 = vrot.slane %v2010, 4
        %2020 = vst.msk [vmem:[#allocation2] sm:$0x3] %vm506, %v1997
        %2021 = vst.msk [vmem:[#allocation2 + $0xc] sm:$0x3] %vm506, %v1999
        %2022 = vst.msk [vmem:[#allocation2 + $0x18] sm:$0x3] %vm506, %v2001
        %2023 = vst.msk [vmem:[#allocation2 + $0x24] sm:$0x3] %vm506, %v2003
        %2024 = vst.msk [vmem:[#allocation2 + $0x30] sm:$0x3] %vm506, %v2005
        %2025 = vst.msk [vmem:[#allocation2 + $0x3c] sm:$0x3] %vm506, %v2007
        %2026 = vst.msk [vmem:[#allocation2 + $0x48] sm:$0x3] %vm506, %v2009
        %2027 = vst.msk [vmem:[#allocation2 + $0x54] sm:$0x3] %vm506, %v2011
        %v2028 = vlaneseq
        %v2029 = vshrl.u32 %v2028, 7
        %v2030 = vadd.s32 %v2029, 8
        %s2031 = smul.u32 %s23, 16
        %s2032 = ssub.s32 %s2031, 4
        %v2033 = vstv %s2032
        %v2034 = vadd.s32 %v2029, %v2033
        %v2035 = vadd.s32 %v2030, %v2033
        %vm2036 = vcmp.ge.s32.totalorder %v2034, 0
        %vm2037 = vcmp.ge.s32.totalorder %v2035, 0
        %v2038 = vld [vmem:[%s3] sm:$0x1]
        %v2039 = vlaneseq
        %v2040 = vshrl.u32 %v2039, 7
        %v2041 = vsub.s32 0, %v2040
        %v2042 = vrot.slane %v2038, %v2041
        %vm2043 = vcmp.lt.s32.totalorder %v2034, %v2042
        %vm2044 = vcmp.lt.s32.totalorder %v2035, %v2042
        %vm2045 = vmand %vm2036, %vm2043
        %vm2046 = vmand %vm2037, %vm2044
        %v2047 = vsel %vm2045, 1, 0
        %v2048 = vsel %vm2046, 1, 0
        %vm2049 = vcmp.eq.s32.totalorder %v2047, 1
        %vm2050 = vcmp.eq.s32.totalorder %v2048, 1
        %v2051 = vsel %vm2049, %v1964, -inf
        %v2052 = vsel %vm2050, %v1965, -inf
        %v2053 = vsel %vm2049, %v1966, -inf
        %v2054 = vsel %vm2050, %v1967, -inf
        %v2055 = vsel %vm2049, %v1968, -inf
        %v2056 = vsel %vm2050, %v1969, -inf
        %v2057 = vsel %vm2049, %v1970, -inf
        %v2058 = vsel %vm2050, %v1971, -inf
        %v2059 = vsel %vm2049, %v1972, -inf
        %v2060 = vsel %vm2050, %v1973, -inf
        %v2061 = vsel %vm2049, %v1974, -inf
        %v2062 = vsel %vm2050, %v1975, -inf
        %v2063 = vsel %vm2049, %v1976, -inf
        %v2064 = vsel %vm2050, %v1977, -inf
        %v2065 = vsel %vm2049, %v1978, -inf
        %v2066 = vsel %vm2050, %v1979, -inf
        %v2067 = vmax.f32 %v2051, %v2052
        %v2068 = vrot.slane %v2067, 4
        %v2069 = vmax.f32 %v2067, %v2068
        %v2070 = vrot.slane %v2069, 2
        %v2071 = vmax.f32 %v2069, %v2070
        %v2072 = vrot.slane %v2071, 1
        %v2073 = vmax.f32 %v2071, %v2072
        %v2074 = vmax.f32 %v2053, %v2054
        %v2075 = vrot.slane %v2074, 4
        %v2076 = vmax.f32 %v2074, %v2075
        %v2077 = vrot.slane %v2076, 2
        %v2078 = vmax.f32 %v2076, %v2077
        %v2079 = vrot.slane %v2078, 1
        %v2080 = vmax.f32 %v2078, %v2079
        %v2081 = vmax.f32 %v2055, %v2056
        %v2082 = vrot.slane %v2081, 4
        %v2083 = vmax.f32 %v2081, %v2082
        %v2084 = vrot.slane %v2083, 2
        %v2085 = vmax.f32 %v2083, %v2084
        %v2086 = vrot.slane %v2085, 1
        %v2087 = vmax.f32 %v2085, %v2086
        %v2088 = vmax.f32 %v2057, %v2058
        %v2089 = vrot.slane %v2088, 4
        %v2090 = vmax.f32 %v2088, %v2089
        %v2091 = vrot.slane %v2090, 2
        %v2092 = vmax.f32 %v2090, %v2091
        %v2093 = vrot.slane %v2092, 1
        %v2094 = vmax.f32 %v2092, %v2093
        %v2095 = vmax.f32 %v2059, %v2060
        %v2096 = vrot.slane %v2095, 4
        %v2097 = vmax.f32 %v2095, %v2096
        %v2098 = vrot.slane %v2097, 2
        %v2099 = vmax.f32 %v2097, %v2098
        %v2100 = vrot.slane %v2099, 1
        %v2101 = vmax.f32 %v2099, %v2100
        %v2102 = vmax.f32 %v2061, %v2062
        %v2103 = vrot.slane %v2102, 4
        %v2104 = vmax.f32 %v2102, %v2103
        %v2105 = vrot.slane %v2104, 2
        %v2106 = vmax.f32 %v2104, %v2105
        %v2107 = vrot.slane %v2106, 1
        %v2108 = vmax.f32 %v2106, %v2107
        %v2109 = vmax.f32 %v2063, %v2064
        %v2110 = vrot.slane %v2109, 4
        %v2111 = vmax.f32 %v2109, %v2110
        %v2112 = vrot.slane %v2111, 2
        %v2113 = vmax.f32 %v2111, %v2112
        %v2114 = vrot.slane %v2113, 1
        %v2115 = vmax.f32 %v2113, %v2114
        %v2116 = vmax.f32 %v2065, %v2066
        %v2117 = vrot.slane %v2116, 4
        %v2118 = vmax.f32 %v2116, %v2117
        %v2119 = vrot.slane %v2118, 2
        %v2120 = vmax.f32 %v2118, %v2119
        %v2121 = vrot.slane %v2120, 1
        %v2122 = vmax.f32 %v2120, %v2121
        %v2123 = vld [vmem:[#allocation3] sm:$0xff]
        %vm2132 = vcmask 1041409
        %v2133 = vsel %vm2132, %v2080, %v2073
        %vm2134 = vcmask 1042434
        %v2135 = vsel %vm2134, %v2087, %v2133
        %vm2136 = vcmask 1043459
        %v2137 = vsel %vm2136, %v2094, %v2135
        %vm2138 = vcmask 1044484
        %v2139 = vsel %vm2138, %v2101, %v2137
        %vm2140 = vcmask 1045509
        %v2141 = vsel %vm2140, %v2108, %v2139
        %vm2142 = vcmask 1046534
        %v2143 = vsel %vm2142, %v2115, %v2141
        %vm2144 = vcmask 1047559
        %v2145 = vsel %vm2144, %v2122, %v2143
        %v2147 = vmax.f32 %v2123, %v2145
        %2148 = vst [vmem:[#allocation3] sm:$0xff] %v2147
        %p2149 = scmp.eq.s32.totalorder %s23, 1
        // Predicated region
        $region94: #{textcnn_forward.1} parent=80 // pred_check
          %p2150 = pneg %p2149
        $region95: #{textcnn_forward.1} parent=80 // pred_check_branch
          %2152 = sbr.rel (%p2150) target = $region97
        $region96: #{textcnn_forward.1} parent=80 // pred_region
          %v2153 = vld [vmem:[#allocation3] sm:$0xff]
          %v2154 = vld [vmem:[%s2] sm:$0x1]
          %v2156 = vlaneseq
          %v2157 = vshrl.u32 %v2156, 7
          %v2158 = vsub.s32 0, %v2157
          %v2159 = vrot.slane %v2154, %v2158
          %v2161 = vadd.f32 %v2153, %v2159
          %v2162 = vld [vmem:[%s4] sm:$0xff]
          %v2163 = vld [vmem:[%s4 + $0x8] sm:$0xff]
          %v2164 = vld [vmem:[%s4 + $0x10] sm:$0xff]
          %v2165 = vld [vmem:[%s4 + $0x18] sm:$0xff]
          %v2166 = vld [vmem:[%s4 + $0x20] sm:$0xff]
          %v2167 = vld [vmem:[%s4 + $0x28] sm:$0xff]
          %v2168 = vld [vmem:[%s4 + $0x30] sm:$0xff]
          %v2169 = vld [vmem:[%s4 + $0x38] sm:$0xff]
          %v2170 = vld [vmem:[%s4 + $0x40] sm:$0xff]
          %v2171 = vld [vmem:[%s4 + $0x48] sm:$0xff]
          %v2172 = vld [vmem:[%s4 + $0x50] sm:$0xff]
          %v2173 = vld [vmem:[%s4 + $0x58] sm:$0xff]
          %v2174 = vld [vmem:[%s4 + $0x60] sm:$0xff]
          %v2175 = vld [vmem:[%s4 + $0x68] sm:$0xff]
          %v2176 = vld [vmem:[%s4 + $0x70] sm:$0xff]
          %v2177 = vld [vmem:[%s4 + $0x78] sm:$0xff]
          %v2178 = vld [vmem:[%s5] sm:$0x1]
          %v2180 = vlaneseq
          %v2181 = vshrl.u32 %v2180, 7
          %v2182 = vsub.s32 0, %v2181
          %v2183 = vrot.slane %v2178, %v2182
          %2185 = vmatprep.subr.mxu0 0.0
          %2186 = vmatpush1.msra.mxu0 %v2177
          %2187 = vmatprep.subr.mxu0 0.0
          %2188 = vmatpush1.msra.mxu0 %v2176
          %2189 = vmatprep.subr.mxu0 0.0
          %2190 = vmatpush1.msra.mxu0 %v2175
          %2191 = vmatprep.subr.mxu0 0.0
          %2192 = vmatpush1.msra.mxu0 %v2174
          %2193 = vmatprep.subr.mxu0 0.0
          %2194 = vmatpush1.msra.mxu0 %v2173
          %2195 = vmatprep.subr.mxu0 0.0
          %2196 = vmatpush1.msra.mxu0 %v2172
          %2197 = vmatprep.subr.mxu0 0.0
          %2198 = vmatpush1.msra.mxu0 %v2171
          %2199 = vmatprep.subr.mxu0 0.0
          %2200 = vmatpush1.msra.mxu0 %v2170
          %2201 = vmatprep.subr.mxu0 0.0
          %2202 = vmatpush1.msra.mxu0 %v2169
          %2203 = vmatprep.subr.mxu0 0.0
          %2204 = vmatpush1.msra.mxu0 %v2168
          %2205 = vmatprep.subr.mxu0 0.0
          %2206 = vmatpush1.msra.mxu0 %v2167
          %2207 = vmatprep.subr.mxu0 0.0
          %2208 = vmatpush1.msra.mxu0 %v2166
          %2209 = vmatprep.subr.mxu0 0.0
          %2210 = vmatpush1.msra.mxu0 %v2165
          %2211 = vmatprep.subr.mxu0 0.0
          %2212 = vmatpush1.msra.mxu0 %v2164
          %2213 = vmatprep.subr.mxu0 0.0
          %2214 = vmatpush1.msra.mxu0 %v2163
          %2215 = vmatprep.subr.mxu0 0.0
          %2216 = vmatpush1.msra.mxu0 %v2162
          %2217 = vmatprep.subr.mxu0 0.0
          %2218 = vmatpush2.msra.mxu0 0.0
          %2219 = vmatprep.subr.mxu0 0.0
          %2220 = vmatpush2.msra.mxu0 0.0
          %2221 = vmatprep.subr.mxu0 0.0
          %2222 = vmatpush2.msra.mxu0 0.0
          %2223 = vmatprep.subr.mxu0 0.0
          %2224 = vmatpush2.msra.mxu0 0.0
          %2225 = vmatprep.subr.mxu0 0.0
          %2226 = vmatpush2.msra.mxu0 0.0
          %2227 = vmatprep.subr.mxu0 0.0
          %2228 = vmatpush2.msra.mxu0 0.0
          %2229 = vmatprep.subr.mxu0 0.0
          %2230 = vmatpush2.msra.mxu0 0.0
          %2231 = vmatprep.subr.mxu0 0.0
          %2232 = vmatpush2.msra.mxu0 0.0
          %2233 = vmatprep.subr.mxu0 0.0
          %2234 = vmatpush2.msra.mxu0 0.0
          %2235 = vmatprep.subr.mxu0 0.0
          %2236 = vmatpush2.msra.mxu0 0.0
          %2237 = vmatprep.subr.mxu0 0.0
          %2238 = vmatpush2.msra.mxu0 0.0
          %2239 = vmatprep.subr.mxu0 0.0
          %2240 = vmatpush2.msra.mxu0 0.0
          %2241 = vmatprep.subr.mxu0 0.0
          %2242 = vmatpush2.msra.mxu0 0.0
          %2243 = vmatprep.subr.mxu0 0.0
          %2244 = vmatpush2.msra.mxu0 0.0
          %2245 = vmatprep.subr.mxu0 0.0
          %2246 = vmatpush2.msra.mxu0 0.0
          %2247 = vmatprep.subr.mxu0 0.0
          %2248 = vmatpush2.msra.mxu0 0.0
          %2249 = vmatprep.mubr.f32.mxu0 0.0
          %2250 = vmatmul.mubr.f32.gmra.mxu0 %v2161
          %v2251 = vpop.f32.mrf.mxu0
          %v2252 = vadd.f32 %v2183, %v2251
          %v2253 = vpop.f32.mrf.mxu0
          %2254 = vdwg.mxu0
          %2255 = vst [vmem:[%s387] sm:$0xff] %v2252
        $region97: #{textcnn_forward.1} parent=80 // pred_fallthru
          _
        %p2256 = scmp.lt.s32.totalorder %s22, 0
        %s2257 = scalar_select %p2256, %s22, 0
        %s2258 = smul.addr %s2257, 8
        %s2259 = scalar_lea.vmem %s6, %s2258
        // Predicated region
        $region98: #{textcnn_forward.1} parent=80 // pred_check
          %p2260 = pneg %p181
        $region99: #{textcnn_forward.1} parent=80 // pred_check_branch
          %2262 = sbr.rel (%p2260) target = $region101
        $region100: #{textcnn_forward.1} parent=80 // pred_region
          _
        $region101: #{textcnn_forward.1} parent=80 // pred_fallthru
          _
        // Predicated region
        $region102: #{textcnn_forward.1} parent=80 // pred_check
          %p2263 = pneg %p181
        $region103: #{textcnn_forward.1} parent=80 // pred_check_branch
          %2265 = sbr.rel (%p2263) target = $region105
        $region104: #{textcnn_forward.1} parent=80 // pred_region
          %p2266 = scmp.lt.s32.totalorder %s22, 0
          %s2267 = scalar_select %p2266, %s22, 0
          %s2268 = smul.addr %s2267, 8
          %s2269 = scalar_lea.vmem %s6, %s2268
        $region105: #{textcnn_forward.1} parent=80 // pred_fallthru
          _
      $region81: #{textcnn_forward.1} parent=5 // pred_fallthru
        _
      %p2270 = scmp.le.s32.totalorder 2, %s13
      // Predicated region
      $region106: #{textcnn_forward.1} parent=5 // pred_check
        %p2271 = pneg %p2270
      $region107: #{textcnn_forward.1} parent=5 // pred_check_branch
        %2273 = sbr.rel (%p2271) target = $region109
      $region108: #{textcnn_forward.1} parent=5 // pred_region
        %s2274 = ssub.s32 %s13, 2
      $region109: #{textcnn_forward.1} parent=5 // pred_fallthru
        _
    $region6: #{textcnn_forward.1} parent=1 // loop_footer
      %s17 = sadd.s32 1, %s13
    $region7: #{textcnn_forward.1} parent=1 // loop_footer_branch
      %12 = sbr.rel target = $region3
    $region8: #{textcnn_forward.1} parent=1 // loop_exit
      _
    %2275 = vsyncpa [#allocation6], 1
    %s2276 = scalar_lea.sflag [#allocation6], 1
    %2277 = vsyncpa %s2276, 1

</llo_original>
